<compile_context>
chip_gen: v7x
topology: tpu7x:2x2x1
jax: 0.10.0
libtpu: 0.0.40
codegen_flags: <defaults>
</compile_context>

<pallas_src>
import jax
import jax.numpy as jnp
from jax.experimental import pallas as pl
from jax.experimental.pallas import tpu as pltpu


def _round_up(x, m):
    return (x + m - 1) // m * m


# ----------------------------------------------------------------------------
# Path 1: tiny vocab — fused gather+concat as one two-hot MXU matmul.
# ----------------------------------------------------------------------------
def _two_hot_matmul_kernel(ids_ref, table_ref, out_ref):
    """out = two_hot(ids) @ combined_table.

    ids_ref:   (tile_n, 2) int32 — col 0: vocab id in [0, V),
                                   col 1: V + selector id (pre-offset in wrapper).
    table_ref: (k_pad, hidden) f32 — combined zero-padded table (grid-invariant).
    out_ref:   (tile_n, hidden) f32 — hidden == full array dim (no lane padding).
    """
    tn = ids_ref.shape[0]
    k_pad = table_ref.shape[0]

    ids = ids_ref[...]                      # single (tile_n, 2) load
    vid = ids[:, 0:1]                       # (tn, 1)
    sid = ids[:, 1:2]                       # (tn, 1), already offset by V

    iota = jax.lax.broadcasted_iota(jnp.int32, (tn, k_pad), 1)
    # Two-hot rows: 1.0 at the vocab row and 1.0 at the selector row; one MXU
    # matmul against the combined table yields concat([emb, sel_emb], axis=1).
    two_hot = ((iota == vid) | (iota == sid)).astype(jnp.float32)
    out_ref[...] = jnp.dot(two_hot, table_ref[...],
                           preferred_element_type=jnp.float32)


# ----------------------------------------------------------------------------
# Path 2: larger vocab — row gather from a VMEM-resident, single-buffered table.
# ----------------------------------------------------------------------------
def _row_gather_kernel(ids_ref, table_hbm, out_ref, table_vmem, copy_sem):
    """Per-node row gather; avoids O(V) MXU work and 2x table VMEM residency.

    ids_ref:    (2*n_pad,) int32 in SMEM (scalar prefetch): [vid0, sid0, vid1, ...]
                (selector ids pre-offset by V; 1-D to avoid 2-D SMEM padding).
    table_hbm:  (k_pad, hidden) f32, memory_space=pl.ANY (not auto-pipelined).
    out_ref:    (tile_n, hidden) f32 output block.
    table_vmem: (k_pad, hidden) f32 scratch — filled once at grid step 0, so the
                grid-invariant table is held exactly once in VMEM.
    copy_sem:   DMA semaphore for the one-time table copy.
    """
    step = pl.program_id(0)

    @pl.when(step == 0)
    def _():
        cp = pltpu.make_async_copy(table_hbm, table_vmem, copy_sem)
        cp.start()
        cp.wait()

    tile_n = out_ref.shape[0]
    base = step * tile_n

    def body(r, carry):
        vid = ids_ref[2 * (base + r)]
        sid = ids_ref[2 * (base + r) + 1]
        # Content rows are zero in the selector columns and vice versa, so the
        # sum of the two gathered rows is exactly concat([emb, sel_emb], axis=1).
        row = table_vmem[pl.ds(vid, 1), :] + table_vmem[pl.ds(sid, 1), :]
        out_ref[pl.ds(r, 1), :] = row
        return carry

    jax.lax.fori_loop(0, tile_n, body, 0)


# ----------------------------------------------------------------------------
# Module init (one-time table build) + jitted forward.
# ----------------------------------------------------------------------------
def make_node_embeddings(emb_table, selector_table, *, tile_n=512,
                         small_vocab_threshold=512, inst2vec_mode="lookup"):
    """Builds the NodeEmbeddings forward. Returns apply(vocab_ids, selector_ids)."""
    assert selector_table is not None, "use_selector_embeddings=False not implemented"
    assert tile_n % 8 == 0 and tile_n > 0

    emb_table = jnp.asarray(emb_table, jnp.float32)
    selector_table = jnp.asarray(selector_table, jnp.float32)
    V, E = emb_table.shape
    S, SD = selector_table.shape
    hidden = E + SD

    use_matmul = (V + S) <= small_vocab_threshold
    # Matmul path: round K to 128 so the MXU contraction dim is fully filled
    # (128 is already a full fill on v5e; HBM-bound anyway at these sizes).
    # Gather path: only sublane-align; padding rows are never touched.
    k_pad = _round_up(V + S, 128 if use_matmul else 8)

    # One-time combined table: rows [0:V, 0:E] = content embeddings,
    # rows [V:V+S, E:] = selector embeddings, zero elsewhere.
    table = jnp.zeros((k_pad, hidden), jnp.float32)
    table = table.at[:V, :E].set(emb_table)
    table = table.at[V:V + S, E:].set(selector_table)
    table = jax.block_until_ready(table)    # materialized at init, not per call

    @jax.jit
    def apply(vocab_ids, selector_ids):
        N = vocab_ids.shape[0]
        n_pad = _round_up(max(N, tile_n), tile_n)

        vid = vocab_ids.reshape(-1).astype(jnp.int32)
        if inst2vec_mode == "none":
            # inst2vec_embeddings == 'none': statements-vs-identifiers 2-row table.
            vid = (vid == 8565).astype(jnp.int32)
        # nn.Embedding raises on out-of-range ids; clip so the kernel can never
        # silently pick a selector/padding row instead.
        vid = jnp.clip(vid, 0, V - 1)
        sid = jnp.clip(selector_ids.reshape(-1).astype(jnp.int32), 0, S - 1) + V
        ids = jnp.stack([vid, sid], axis=1)                 # (N, 2) int32
        ids = jnp.pad(ids, ((0, n_pad - N), (0, 0)))        # padded rows discarded

        grid = (n_pad // tile_n,)
        out_shape = jax.ShapeDtypeStruct((n_pad, hidden), jnp.float32)
        table_bytes = k_pad * hidden * 4
        out_bytes = n_pad * hidden * 4

        if use_matmul:
            cost = pl.CostEstimate(
                flops=2 * n_pad * k_pad * hidden,
                transcendentals=0,
                bytes_accessed=n_pad * 2 * 4 + table_bytes + out_bytes)
            out_padded = pl.pallas_call(
                _two_hot_matmul_kernel,
                out_shape=out_shape,
                grid_spec=pltpu.PrefetchScalarGridSpec(
                    num_scalar_prefetch=0,
                    grid=grid,
                    in_specs=[
                        pl.BlockSpec((tile_n, 2), lambda i: (i, 0)),      # merged ids
                        pl.BlockSpec((k_pad, hidden), lambda i: (0, 0)),  # tiny table
                    ],
                    out_specs=pl.BlockSpec((tile_n, hidden), lambda i: (i, 0)),
                ),
                compiler_params=pltpu.CompilerParams(
                    dimension_semantics=("parallel",)),
                cost_estimate=cost,
            )(ids, table)
        else:
            ids_flat = ids.reshape(-1)   # (2*n_pad,) 1-D -> no 2-D SMEM padding blowup
            cost = pl.CostEstimate(
                flops=2 * n_pad * hidden,
                transcendentals=0,
                bytes_accessed=2 * n_pad * 4 + table_bytes + out_bytes)
            out_padded = pl.pallas_call(
                _row_gather_kernel,
                out_shape=out_shape,
                grid_spec=pltpu.PrefetchScalarGridSpec(
                    num_scalar_prefetch=1,               # ids -> SMEM
                    grid=grid,
                    in_specs=[pl.BlockSpec(memory_space=pl.ANY)],   # table stays in HBM
                    out_specs=pl.BlockSpec((tile_n, hidden), lambda i, ids_s: (i, 0)),
                    scratch_shapes=[
                        pltpu.VMEM((k_pad, hidden), jnp.float32),   # single-buffered table
                        pltpu.SemaphoreType.DMA,
                    ],
                ),
                compiler_params=pltpu.CompilerParams(
                    # "arbitrary": the one-time table copy at step 0 must precede all
                    # other steps; a megacore-parallel split would skip it on core 1.
                    dimension_semantics=("arbitrary",)),
                cost_estimate=cost,
            )(ids_flat, table)

        return out_padded[:N, :]

    return apply


if __name__ == "__main__":
    key = jax.random.PRNGKey(0)
    kt1, kv1, ks1, kt2, kv2, ks2 = jax.random.split(key, 6)

    # Selector embedding table: [[0, 50], [50, 0]]
    selector_table = jnp.array([[0.0, 50.0], [50.0, 0.0]], dtype=jnp.float32)

    # --- Config 1: tiny vocab ('constant_random' init) -> two-hot MXU path ----
    V1, E1, N1 = 64, 30, 600          # hidden = 32; n_pad = 1024 -> 2 grid steps
    emb1 = jax.random.uniform(kt1, (V1, E1), dtype=jnp.float32)
    vid1 = jax.random.randint(kv1, (N1, 1), 0, V1, dtype=jnp.int32)
    sid1 = jax.random.randint(ks1, (N1, 1), 0, 2, dtype=jnp.int32)

    node_embeddings_small = make_node_embeddings(emb1, selector_table)
    out1 = jax.block_until_ready(node_embeddings_small(vid1, sid1))
    ref1 = jnp.concatenate([jnp.take(emb1, vid1[:, 0], axis=0),
                            jnp.take(selector_table, sid1[:, 0], axis=0)], axis=1)
    assert out1.shape == (N1, E1 + 2), out1.shape
    assert jnp.allclose(out1, ref1, atol=1e-6), "matmul path mismatch vs reference"

    # --- Config 2: larger vocab -> scalar-prefetch row-gather path ------------
    V2, E2, N2 = 640, 48, 300         # hidden = 50; V+S > 512 threshold
    emb2 = jax.random.uniform(kt2, (V2, E2), dtype=jnp.float32)
    vid2 = jax.random.randint(kv2, (N2, 1), 0, V2, dtype=jnp.int32)
    sid2 = jax.random.randint(ks2, (N2, 1), 0, 2, dtype=jnp.int32)

    node_embeddings_large = make_node_embeddings(emb2, selector_table, tile_n=256)
    out2 = jax.block_until_ready(node_embeddings_large(vid2, sid2))
    ref2 = jnp.concatenate([jnp.take(emb2, vid2[:, 0], axis=0),
                            jnp.take(selector_table, sid2[:, 0], axis=0)], axis=1)
    assert out2.shape == (N2, E2 + 2), out2.shape
    assert jnp.allclose(out2, ref2, atol=1e-6), "gather path mismatch vs reference"

    print("KERNEL_OK")
</pallas_src>

<mosaic_0001>
module attributes {stable_mosaic.version = 11 : i64} {
  func.func @_two_hot_matmul_kernel(%arg0: i32, %arg1: memref<512x2xi32, #tpu.memory_space<vmem>>, %arg2: memref<128x32xf32, #tpu.memory_space<vmem>>, %arg3: memref<512x32xf32, #tpu.memory_space<vmem>>) attributes {dimension_semantics = [#tpu.dimension_semantics<parallel>], iteration_bounds = array<i64: 2>, scalar_prefetch = 0 : i64, scratch_operands = 0 : i64, tpu.core_type = #tpu.core_type<tc>, window_params = [{transform_indices = @transform_0, window_bounds = array<i64: 512, 2>}, {pipeline_mode = #tpu.pipeline_mode<synchronous>, transform_indices = @transform_1, window_bounds = array<i64: 128, 32>}, {transform_indices = @transform_2, window_bounds = array<i64: 512, 32>}]} {
    %c0 = arith.constant 0 : index
    %c0_0 = arith.constant 0 : index
    %0 = vector.load %arg1[%c0, %c0_0] : memref<512x2xi32, #tpu.memory_space<vmem>>, vector<512x2xi32>
    %1 = vector.extract_strided_slice %0 {offsets = [0, 0], sizes = [512, 1], strides = [1, 1]} : vector<512x2xi32> to vector<512x1xi32>
    %2 = vector.extract_strided_slice %0 {offsets = [0, 1], sizes = [512, 1], strides = [1, 1]} : vector<512x2xi32> to vector<512x1xi32>
    %3 = tpu.iota {dimensions = array<i32: 1>} : vector<512x128xi32>
    %4 = vector.broadcast %1 : vector<512x1xi32> to vector<512x128xi32>
    %5 = arith.cmpi eq, %3, %4 : vector<512x128xi32>
    %6 = vector.broadcast %2 : vector<512x1xi32> to vector<512x128xi32>
    %7 = arith.cmpi eq, %3, %6 : vector<512x128xi32>
    %8 = arith.ori %5, %7 : vector<512x128xi1>
    %9 = arith.extui %8 : vector<512x128xi1> to vector<512x128xi32>
    %10 = arith.sitofp %9 : vector<512x128xi32> to vector<512x128xf32>
    %c0_1 = arith.constant 0 : index
    %c0_2 = arith.constant 0 : index
    %11 = vector.load %arg2[%c0_1, %c0_2] : memref<128x32xf32, #tpu.memory_space<vmem>>, vector<128x32xf32>
    %cst = arith.constant dense<0.000000e+00> : vector<512x32xf32>
    %12 = tpu.matmul %10, %11, %cst {dimension_numbers = #tpu.dot_dimension_numbers<[1], [0], [0], [1], [0, 0, 1, 1], [], []>} : vector<512x128xf32>, vector<128x32xf32>, vector<512x32xf32> -> vector<512x32xf32>
    %c0_3 = arith.constant 0 : index
    %c0_4 = arith.constant 0 : index
    %13 = vector.load %arg3[%c0_3, %c0_4] : memref<512x32xf32, #tpu.memory_space<vmem>>, vector<512x32xf32>
    tpu.vector_store %arg3[%c0_3, %c0_4], %12 {strides = array<i32>} : memref<512x32xf32, #tpu.memory_space<vmem>>, vector<512x32xf32>,
    return
  }
  func.func @transform_0(%arg0: i32) -> (i32, i32) {
    %c0_i32 = arith.constant 0 : i32
    %c0_i32_0 = arith.constant 0 : i32
    return %arg0, %c0_i32 : i32, i32
  }
  func.func @transform_1(%arg0: i32) -> (i32, i32) {
    %c0_i32 = arith.constant 0 : i32
    %c0_i32_0 = arith.constant 0 : i32
    %c0_i32_1 = arith.constant 0 : i32
    return %c0_i32, %c0_i32_0 : i32, i32
  }
  func.func @transform_2(%arg0: i32) -> (i32, i32) {
    %c0_i32 = arith.constant 0 : i32
    %c0_i32_0 = arith.constant 0 : i32
    return %arg0, %c0_i32 : i32, i32
  }
}

</mosaic_0001>

<llo_original>
// kernel: apply.1
$region0: #{apply.1}
  #allocation0 [shape = 'u32[]', space=smem, size = 0x4, offset = 0x4, fixed_abs, tag = 'smem constant byte address 0x4 - core index']
  #allocation1 [shape = 'u32[144,128]{1,0:T(1,128)}', space=vmem, size = 0x12000, scoped, tag = 'internal scratch']
  %s0 = inlined_call_operand.vmem [shape: s32[1024,2], index: 0, kind: input, shape index: {}]
  %s1 = inlined_call_operand.vmem [shape: f32[128,32], index: 1, kind: input, shape index: {}]
  %s2 = inlined_call_operand.vmem [shape: f32[1024,32], index: 2, kind: output, shape index: {}]
  %s3 = sld [smem:[#allocation0]]
  $region41: #{apply.1} parent=0
    _
  %s5 = ssub.s32 1, %s3
  %s6 = scalar_select 0, %s5, %s3
  loop: start=0, step=1, limit=4
  $region2: #{apply.1} parent=0 // loop_pre_header
    _
  $region3: #{apply.1} parent=0 // loop_header
    %s8 = sphi 0, %s12
    %p9 = scmp.ge.s32.totalorder %s8, 4
    %s18 = sphi 0, %s20
    %s21 = sphi 0, %s18
    %s22 = sphi 0, %s21
    %s38 = sphi 0, %s22
    %s42 = sphi 0, %s42
    %s44 = sphi 0, %s42
    %s45 = sphi 0, %s44
    %s59 = sphi 0, %s45
    %s65 = sphi 0, %s67
    %s68 = sphi 0, %s65
    %s69 = sphi 0, %s68
    %s85 = sphi 0, %s69
  $region4: #{apply.1} parent=0 // loop_header_branch
    %11 = sbr.rel (%p9) target = $region8
  $region5: #{apply.1} parent=0 // loop_body
    %s13 = ssub.s32 %s8, 1
    %s14 = ssub.s32 %s8, 2
    %s15 = sadd.s32 %s8, 1
    %s16 = ssub.s32 %s8, %s15
    %p17 = scmp.eq.s32.totalorder %s16, 0
    %s19 = sadd.s32 %s18, 1
    %s20 = scalar_select %p17, %s18, %s19
    %p23 = pneg %p17
    %p24 = scmp.eq.s32.totalorder %s8, 1
    %p25 = por %p23, %p24
    %p26 = scmp.ne.s32.totalorder %s18, %s21
    %p27 = scmp.eq.s32.totalorder %s8, 0
    %p28 = por %p26, %p27
    %p29 = scmp.ne.s32.totalorder %s18, %s21
    %p30 = scmp.eq.s32.totalorder %s13, 1
    %p31 = por %p29, %p30
    %p32 = scmp.ne.s32.totalorder %s21, %s22
    %p33 = scmp.eq.s32.totalorder %s13, 0
    %p34 = por %p32, %p33
    %p35 = scmp.ne.s32.totalorder %s21, %s22
    %p36 = scmp.eq.s32.totalorder %s14, 1
    %p37 = por %p35, %p36
    %p39 = scmp.ne.s32.totalorder %s22, %s38
    %p40 = scmp.eq.s32.totalorder %s14, 0
    %p41 = por %p39, %p40
    %s43 = sadd.s32 %s42, 1
    %p46 = scmp.eq.s32.totalorder %s8, 1
    %p47 = scmp.ne.s32.totalorder %s42, %s44
    %p48 = scmp.eq.s32.totalorder %s8, 0
    %p49 = por %p47, %p48
    %p50 = scmp.ne.s32.totalorder %s42, %s44
    %p51 = scmp.eq.s32.totalorder %s13, 1
    %p52 = por %p50, %p51
    %p53 = scmp.ne.s32.totalorder %s44, %s45
    %p54 = scmp.eq.s32.totalorder %s13, 0
    %p55 = por %p53, %p54
    %p56 = scmp.ne.s32.totalorder %s44, %s45
    %p57 = scmp.eq.s32.totalorder %s14, 1
    %p58 = por %p56, %p57
    %p60 = scmp.ne.s32.totalorder %s45, %s59
    %p61 = scmp.eq.s32.totalorder %s14, 0
    %p62 = por %p60, %p61
    %s63 = ssub.s32 %s8, %s15
    %p64 = scmp.eq.s32.totalorder %s63, 0
    %s66 = sadd.s32 %s65, 1
    %s67 = scalar_select %p64, %s65, %s66
    %p70 = pneg %p64
    %p71 = scmp.eq.s32.totalorder %s8, 1
    %p72 = por %p70, %p71
    %p73 = scmp.ne.s32.totalorder %s65, %s68
    %p74 = scmp.eq.s32.totalorder %s8, 0
    %p75 = por %p73, %p74
    %p76 = scmp.ne.s32.totalorder %s65, %s68
    %p77 = scmp.eq.s32.totalorder %s13, 1
    %p78 = por %p76, %p77
    %p79 = scmp.ne.s32.totalorder %s68, %s69
    %p80 = scmp.eq.s32.totalorder %s13, 0
    %p81 = por %p79, %p80
    %p82 = scmp.ne.s32.totalorder %s68, %s69
    %p83 = scmp.eq.s32.totalorder %s14, 1
    %p84 = por %p82, %p83
    %p86 = scmp.ne.s32.totalorder %s69, %s85
    %p87 = scmp.eq.s32.totalorder %s14, 0
    %p88 = por %p86, %p87
    %p89 = scmp.le.s32.totalorder 1, %s8
    %p90 = scmp.lt.s32.totalorder %s8, 3
    %p91 = pnand %p89, %p90
    %p92 = pneg %p91
    // Predicated region
    $region9: #{apply.1} parent=5 // pred_check
      _
    $region10: #{apply.1} parent=5 // pred_check_branch
      %94 = sbr.rel (%p91) target = $region12
    $region11: #{apply.1} parent=5 // pred_region
      %s95 = ssub.s32 %s8, 1
      // Predicated region
      $region13: #{apply.1} parent=11 // pred_check
        %p96 = pneg %p55
      $region14: #{apply.1} parent=11 // pred_check_branch
        %98 = sbr.rel (%p96) target = $region16
      $region15: #{apply.1} parent=11 // pred_region
        _
      $region16: #{apply.1} parent=11 // pred_fallthru
        _
    $region12: #{apply.1} parent=5 // pred_fallthru
      _
    %p99 = scmp.lt.s32.totalorder %s8, 2
    // Predicated region
    $region17: #{apply.1} parent=5 // pred_check
      %p100 = pneg %p99
    $region18: #{apply.1} parent=5 // pred_check_branch
      %102 = sbr.rel (%p100) target = $region20
    $region19: #{apply.1} parent=5 // pred_region
      // Predicated region
      $region21: #{apply.1} parent=19 // pred_check
        %p103 = pneg %p28
      $region22: #{apply.1} parent=19 // pred_check_branch
        %105 = sbr.rel (%p103) target = $region24
      $region23: #{apply.1} parent=19 // pred_region
        %s106 = smul.u32 64, %s8
        %p107 = scmp.lt.s32.totalorder %s106, 127
        %s108 = scalar_select %p107, %s106, 127
        %s109 = smul.addr %s108, 8
        %s110 = scalar_lea.vmem %s0, %s109
        %s111 = smul.u32 64, %s8
      $region24: #{apply.1} parent=19 // pred_fallthru
        _
    $region20: #{apply.1} parent=5 // pred_fallthru
      _
    %p112 = scmp.le.s32.totalorder 1, %s8
    %p113 = scmp.lt.s32.totalorder %s8, 3
    %p114 = pnand %p112, %p113
    %p115 = pneg %p114
    // Predicated region
    $region25: #{apply.1} parent=5 // pred_check
      _
    $region26: #{apply.1} parent=5 // pred_check_branch
      %117 = sbr.rel (%p114) target = $region28
    $region27: #{apply.1} parent=5 // pred_region
      %s118 = ssub.s32 %s8, 1
      %s119 = smul.u32 64, %s13
      %p120 = scmp.lt.s32.totalorder %s119, 127
      %s121 = scalar_select %p120, %s119, 127
      %s122 = smul.addr %s121, 8
      %s123 = scalar_lea.vmem %s0, %s122
      %p124 = pneg %p34
      %p125 = pneg %p31
      %p126 = pneg %p55
      %p127 = pneg %p52
      %p128 = pneg %p81
      %p129 = pneg %p78
      %s130 = smul.u32 64, %s13
      %p131 = scmp.lt.s32.totalorder %s130, 127
      %s132 = scalar_select %p131, %s130, 127
      %s133 = smul.addr %s132, 8
      %s134 = scalar_lea.vmem %s2, %s133
      %s135 = smul.u32 64, %s13
      %p136 = scmp.lt.s32.totalorder %s135, 127
      %s137 = scalar_select %p136, %s135, 127
      %s138 = smul.addr %s137, 8
      %s139 = scalar_lea.vmem %s0, %s138
      %s140 = smul.u32 64, %s13
      %s141 = smul.u32 64, %s13
      %p142 = scmp.lt.s32.totalorder %s141, 127
      %s143 = scalar_select %p142, %s141, 127
      %s144 = smul.addr %s143, 8
      %s145 = scalar_lea.vmem %s2, %s144
      %s146 = smul.u32 64, %s13
      %v147 = vld [vmem:[%s139] sm:$0xff]
      %v148 = vld [vmem:[%s139 + $0x8] sm:$0xff]
      %v149 = vld [vmem:[%s139 + $0x10] sm:$0xff]
      %v150 = vld [vmem:[%s139 + $0x18] sm:$0xff]
      %v151 = vld [vmem:[%s139 + $0x20] sm:$0xff]
      %v152 = vld [vmem:[%s139 + $0x28] sm:$0xff]
      %v153 = vld [vmem:[%s139 + $0x30] sm:$0xff]
      %v154 = vld [vmem:[%s139 + $0x38] sm:$0xff]
      %v155 = vld [vmem:[%s139 + $0x40] sm:$0xff]
      %v156 = vld [vmem:[%s139 + $0x48] sm:$0xff]
      %v157 = vld [vmem:[%s139 + $0x50] sm:$0xff]
      %v158 = vld [vmem:[%s139 + $0x58] sm:$0xff]
      %v159 = vld [vmem:[%s139 + $0x60] sm:$0xff]
      %v160 = vld [vmem:[%s139 + $0x68] sm:$0xff]
      %v161 = vld [vmem:[%s139 + $0x70] sm:$0xff]
      %v162 = vld [vmem:[%s139 + $0x78] sm:$0xff]
      %v163 = vld [vmem:[%s139 + $0x80] sm:$0xff]
      %v164 = vld [vmem:[%s139 + $0x88] sm:$0xff]
      %v165 = vld [vmem:[%s139 + $0x90] sm:$0xff]
      %v166 = vld [vmem:[%s139 + $0x98] sm:$0xff]
      %v167 = vld [vmem:[%s139 + $0xa0] sm:$0xff]
      %v168 = vld [vmem:[%s139 + $0xa8] sm:$0xff]
      %v169 = vld [vmem:[%s139 + $0xb0] sm:$0xff]
      %v170 = vld [vmem:[%s139 + $0xb8] sm:$0xff]
      %v171 = vld [vmem:[%s139 + $0xc0] sm:$0xff]
      %v172 = vld [vmem:[%s139 + $0xc8] sm:$0xff]
      %v173 = vld [vmem:[%s139 + $0xd0] sm:$0xff]
      %v174 = vld [vmem:[%s139 + $0xd8] sm:$0xff]
      %v175 = vld [vmem:[%s139 + $0xe0] sm:$0xff]
      %v176 = vld [vmem:[%s139 + $0xe8] sm:$0xff]
      %v177 = vld [vmem:[%s139 + $0xf0] sm:$0xff]
      %v178 = vld [vmem:[%s139 + $0xf8] sm:$0xff]
      %v179 = vld [vmem:[%s139 + $0x100] sm:$0xff]
      %v180 = vld [vmem:[%s139 + $0x108] sm:$0xff]
      %v181 = vld [vmem:[%s139 + $0x110] sm:$0xff]
      %v182 = vld [vmem:[%s139 + $0x118] sm:$0xff]
      %v183 = vld [vmem:[%s139 + $0x120] sm:$0xff]
      %v184 = vld [vmem:[%s139 + $0x128] sm:$0xff]
      %v185 = vld [vmem:[%s139 + $0x130] sm:$0xff]
      %v186 = vld [vmem:[%s139 + $0x138] sm:$0xff]
      %v187 = vld [vmem:[%s139 + $0x140] sm:$0xff]
      %v188 = vld [vmem:[%s139 + $0x148] sm:$0xff]
      %v189 = vld [vmem:[%s139 + $0x150] sm:$0xff]
      %v190 = vld [vmem:[%s139 + $0x158] sm:$0xff]
      %v191 = vld [vmem:[%s139 + $0x160] sm:$0xff]
      %v192 = vld [vmem:[%s139 + $0x168] sm:$0xff]
      %v193 = vld [vmem:[%s139 + $0x170] sm:$0xff]
      %v194 = vld [vmem:[%s139 + $0x178] sm:$0xff]
      %v195 = vld [vmem:[%s139 + $0x180] sm:$0xff]
      %v196 = vld [vmem:[%s139 + $0x188] sm:$0xff]
      %v197 = vld [vmem:[%s139 + $0x190] sm:$0xff]
      %v198 = vld [vmem:[%s139 + $0x198] sm:$0xff]
      %v199 = vld [vmem:[%s139 + $0x1a0] sm:$0xff]
      %v200 = vld [vmem:[%s139 + $0x1a8] sm:$0xff]
      %v201 = vld [vmem:[%s139 + $0x1b0] sm:$0xff]
      %v202 = vld [vmem:[%s139 + $0x1b8] sm:$0xff]
      %v203 = vld [vmem:[%s139 + $0x1c0] sm:$0xff]
      %v204 = vld [vmem:[%s139 + $0x1c8] sm:$0xff]
      %v205 = vld [vmem:[%s139 + $0x1d0] sm:$0xff]
      %v206 = vld [vmem:[%s139 + $0x1d8] sm:$0xff]
      %v207 = vld [vmem:[%s139 + $0x1e0] sm:$0xff]
      %v208 = vld [vmem:[%s139 + $0x1e8] sm:$0xff]
      %v209 = vld [vmem:[%s139 + $0x1f0] sm:$0xff]
      %v210 = vld [vmem:[%s139 + $0x1f8] sm:$0xff]
      %v211 = vlaneseq
      %v212 = vand.u32 %v211, 127
      %213 = vset.pattern.permute.xlu0 0
      %214 = vperm.xlu0 %213, %v147
      %v215 = vpop.permute.xlu0 %214
      %216 = vset.pattern.permute.xlu0 0
      %217 = vperm.xlu0 %216, %v148
      %v218 = vpop.permute.xlu0 %217
      %219 = vset.pattern.permute.xlu0 0
      %220 = vperm.xlu0 %219, %v149
      %v221 = vpop.permute.xlu0 %220
      %222 = vset.pattern.permute.xlu0 0
      %223 = vperm.xlu0 %222, %v150
      %v224 = vpop.permute.xlu0 %223
      %225 = vset.pattern.permute.xlu0 0
      %226 = vperm.xlu0 %225, %v151
      %v227 = vpop.permute.xlu0 %226
      %228 = vset.pattern.permute.xlu0 0
      %229 = vperm.xlu0 %228, %v152
      %v230 = vpop.permute.xlu0 %229
      %231 = vset.pattern.permute.xlu0 0
      %232 = vperm.xlu0 %231, %v153
      %v233 = vpop.permute.xlu0 %232
      %234 = vset.pattern.permute.xlu0 0
      %235 = vperm.xlu0 %234, %v154
      %v236 = vpop.permute.xlu0 %235
      %237 = vset.pattern.permute.xlu0 0
      %238 = vperm.xlu0 %237, %v155
      %v239 = vpop.permute.xlu0 %238
      %240 = vset.pattern.permute.xlu0 0
      %241 = vperm.xlu0 %240, %v156
      %v242 = vpop.permute.xlu0 %241
      %243 = vset.pattern.permute.xlu0 0
      %244 = vperm.xlu0 %243, %v157
      %v245 = vpop.permute.xlu0 %244
      %246 = vset.pattern.permute.xlu0 0
      %247 = vperm.xlu0 %246, %v158
      %v248 = vpop.permute.xlu0 %247
      %249 = vset.pattern.permute.xlu0 0
      %250 = vperm.xlu0 %249, %v159
      %v251 = vpop.permute.xlu0 %250
      %252 = vset.pattern.permute.xlu0 0
      %253 = vperm.xlu0 %252, %v160
      %v254 = vpop.permute.xlu0 %253
      %255 = vset.pattern.permute.xlu0 0
      %256 = vperm.xlu0 %255, %v161
      %v257 = vpop.permute.xlu0 %256
      %258 = vset.pattern.permute.xlu0 0
      %259 = vperm.xlu0 %258, %v162
      %v260 = vpop.permute.xlu0 %259
      %261 = vset.pattern.permute.xlu0 0
      %262 = vperm.xlu0 %261, %v163
      %v263 = vpop.permute.xlu0 %262
      %264 = vset.pattern.permute.xlu0 0
      %265 = vperm.xlu0 %264, %v164
      %v266 = vpop.permute.xlu0 %265
      %267 = vset.pattern.permute.xlu0 0
      %268 = vperm.xlu0 %267, %v165
      %v269 = vpop.permute.xlu0 %268
      %270 = vset.pattern.permute.xlu0 0
      %271 = vperm.xlu0 %270, %v166
      %v272 = vpop.permute.xlu0 %271
      %273 = vset.pattern.permute.xlu0 0
      %274 = vperm.xlu0 %273, %v167
      %v275 = vpop.permute.xlu0 %274
      %276 = vset.pattern.permute.xlu0 0
      %277 = vperm.xlu0 %276, %v168
      %v278 = vpop.permute.xlu0 %277
      %279 = vset.pattern.permute.xlu0 0
      %280 = vperm.xlu0 %279, %v169
      %v281 = vpop.permute.xlu0 %280
      %282 = vset.pattern.permute.xlu0 0
      %283 = vperm.xlu0 %282, %v170
      %v284 = vpop.permute.xlu0 %283
      %285 = vset.pattern.permute.xlu0 0
      %286 = vperm.xlu0 %285, %v171
      %v287 = vpop.permute.xlu0 %286
      %288 = vset.pattern.permute.xlu0 0
      %289 = vperm.xlu0 %288, %v172
      %v290 = vpop.permute.xlu0 %289
      %291 = vset.pattern.permute.xlu0 0
      %292 = vperm.xlu0 %291, %v173
      %v293 = vpop.permute.xlu0 %292
      %294 = vset.pattern.permute.xlu0 0
      %295 = vperm.xlu0 %294, %v174
      %v296 = vpop.permute.xlu0 %295
      %297 = vset.pattern.permute.xlu0 0
      %298 = vperm.xlu0 %297, %v175
      %v299 = vpop.permute.xlu0 %298
      %300 = vset.pattern.permute.xlu0 0
      %301 = vperm.xlu0 %300, %v176
      %v302 = vpop.permute.xlu0 %301
      %303 = vset.pattern.permute.xlu0 0
      %304 = vperm.xlu0 %303, %v177
      %v305 = vpop.permute.xlu0 %304
      %306 = vset.pattern.permute.xlu0 0
      %307 = vperm.xlu0 %306, %v178
      %v308 = vpop.permute.xlu0 %307
      %309 = vset.pattern.permute.xlu0 0
      %310 = vperm.xlu0 %309, %v179
      %v311 = vpop.permute.xlu0 %310
      %312 = vset.pattern.permute.xlu0 0
      %313 = vperm.xlu0 %312, %v180
      %v314 = vpop.permute.xlu0 %313
      %315 = vset.pattern.permute.xlu0 0
      %316 = vperm.xlu0 %315, %v181
      %v317 = vpop.permute.xlu0 %316
      %318 = vset.pattern.permute.xlu0 0
      %319 = vperm.xlu0 %318, %v182
      %v320 = vpop.permute.xlu0 %319
      %321 = vset.pattern.permute.xlu0 0
      %322 = vperm.xlu0 %321, %v183
      %v323 = vpop.permute.xlu0 %322
      %324 = vset.pattern.permute.xlu0 0
      %325 = vperm.xlu0 %324, %v184
      %v326 = vpop.permute.xlu0 %325
      %327 = vset.pattern.permute.xlu0 0
      %328 = vperm.xlu0 %327, %v185
      %v329 = vpop.permute.xlu0 %328
      %330 = vset.pattern.permute.xlu0 0
      %331 = vperm.xlu0 %330, %v186
      %v332 = vpop.permute.xlu0 %331
      %333 = vset.pattern.permute.xlu0 0
      %334 = vperm.xlu0 %333, %v187
      %v335 = vpop.permute.xlu0 %334
      %336 = vset.pattern.permute.xlu0 0
      %337 = vperm.xlu0 %336, %v188
      %v338 = vpop.permute.xlu0 %337
      %339 = vset.pattern.permute.xlu0 0
      %340 = vperm.xlu0 %339, %v189
      %v341 = vpop.permute.xlu0 %340
      %342 = vset.pattern.permute.xlu0 0
      %343 = vperm.xlu0 %342, %v190
      %v344 = vpop.permute.xlu0 %343
      %345 = vset.pattern.permute.xlu0 0
      %346 = vperm.xlu0 %345, %v191
      %v347 = vpop.permute.xlu0 %346
      %348 = vset.pattern.permute.xlu0 0
      %349 = vperm.xlu0 %348, %v192
      %v350 = vpop.permute.xlu0 %349
      %351 = vset.pattern.permute.xlu0 0
      %352 = vperm.xlu0 %351, %v193
      %v353 = vpop.permute.xlu0 %352
      %354 = vset.pattern.permute.xlu0 0
      %355 = vperm.xlu0 %354, %v194
      %v356 = vpop.permute.xlu0 %355
      %357 = vset.pattern.permute.xlu0 0
      %358 = vperm.xlu0 %357, %v195
      %v359 = vpop.permute.xlu0 %358
      %360 = vset.pattern.permute.xlu0 0
      %361 = vperm.xlu0 %360, %v196
      %v362 = vpop.permute.xlu0 %361
      %363 = vset.pattern.permute.xlu0 0
      %364 = vperm.xlu0 %363, %v197
      %v365 = vpop.permute.xlu0 %364
      %366 = vset.pattern.permute.xlu0 0
      %367 = vperm.xlu0 %366, %v198
      %v368 = vpop.permute.xlu0 %367
      %369 = vset.pattern.permute.xlu0 0
      %370 = vperm.xlu0 %369, %v199
      %v371 = vpop.permute.xlu0 %370
      %372 = vset.pattern.permute.xlu0 0
      %373 = vperm.xlu0 %372, %v200
      %v374 = vpop.permute.xlu0 %373
      %375 = vset.pattern.permute.xlu0 0
      %376 = vperm.xlu0 %375, %v201
      %v377 = vpop.permute.xlu0 %376
      %378 = vset.pattern.permute.xlu0 0
      %379 = vperm.xlu0 %378, %v202
      %v380 = vpop.permute.xlu0 %379
      %381 = vset.pattern.permute.xlu0 0
      %382 = vperm.xlu0 %381, %v203
      %v383 = vpop.permute.xlu0 %382
      %384 = vset.pattern.permute.xlu0 0
      %385 = vperm.xlu0 %384, %v204
      %v386 = vpop.permute.xlu0 %385
      %387 = vset.pattern.permute.xlu0 0
      %388 = vperm.xlu0 %387, %v205
      %v389 = vpop.permute.xlu0 %388
      %390 = vset.pattern.permute.xlu0 0
      %391 = vperm.xlu0 %390, %v206
      %v392 = vpop.permute.xlu0 %391
      %393 = vset.pattern.permute.xlu0 0
      %394 = vperm.xlu0 %393, %v207
      %v395 = vpop.permute.xlu0 %394
      %396 = vset.pattern.permute.xlu0 0
      %397 = vperm.xlu0 %396, %v208
      %v398 = vpop.permute.xlu0 %397
      %399 = vset.pattern.permute.xlu0 0
      %400 = vperm.xlu0 %399, %v209
      %v401 = vpop.permute.xlu0 %400
      %402 = vset.pattern.permute.xlu0 0
      %403 = vperm.xlu0 %402, %v210
      %v404 = vpop.permute.xlu0 %403
      %vm405 = vcmp.eq.s32.totalorder %v212, %v215
      %vm406 = vcmp.eq.s32.totalorder %v212, %v218
      %vm407 = vcmp.eq.s32.totalorder %v212, %v221
      %vm408 = vcmp.eq.s32.totalorder %v212, %v224
      %vm409 = vcmp.eq.s32.totalorder %v212, %v227
      %vm410 = vcmp.eq.s32.totalorder %v212, %v230
      %vm411 = vcmp.eq.s32.totalorder %v212, %v233
      %vm412 = vcmp.eq.s32.totalorder %v212, %v236
      %vm413 = vcmp.eq.s32.totalorder %v212, %v239
      %vm414 = vcmp.eq.s32.totalorder %v212, %v242
      %vm415 = vcmp.eq.s32.totalorder %v212, %v245
      %vm416 = vcmp.eq.s32.totalorder %v212, %v248
      %vm417 = vcmp.eq.s32.totalorder %v212, %v251
      %vm418 = vcmp.eq.s32.totalorder %v212, %v254
      %vm419 = vcmp.eq.s32.totalorder %v212, %v257
      %vm420 = vcmp.eq.s32.totalorder %v212, %v260
      %vm421 = vcmp.eq.s32.totalorder %v212, %v263
      %vm422 = vcmp.eq.s32.totalorder %v212, %v266
      %vm423 = vcmp.eq.s32.totalorder %v212, %v269
      %vm424 = vcmp.eq.s32.totalorder %v212, %v272
      %vm425 = vcmp.eq.s32.totalorder %v212, %v275
      %vm426 = vcmp.eq.s32.totalorder %v212, %v278
      %vm427 = vcmp.eq.s32.totalorder %v212, %v281
      %vm428 = vcmp.eq.s32.totalorder %v212, %v284
      %vm429 = vcmp.eq.s32.totalorder %v212, %v287
      %vm430 = vcmp.eq.s32.totalorder %v212, %v290
      %vm431 = vcmp.eq.s32.totalorder %v212, %v293
      %vm432 = vcmp.eq.s32.totalorder %v212, %v296
      %vm433 = vcmp.eq.s32.totalorder %v212, %v299
      %vm434 = vcmp.eq.s32.totalorder %v212, %v302
      %vm435 = vcmp.eq.s32.totalorder %v212, %v305
      %vm436 = vcmp.eq.s32.totalorder %v212, %v308
      %vm437 = vcmp.eq.s32.totalorder %v212, %v311
      %vm438 = vcmp.eq.s32.totalorder %v212, %v314
      %vm439 = vcmp.eq.s32.totalorder %v212, %v317
      %vm440 = vcmp.eq.s32.totalorder %v212, %v320
      %vm441 = vcmp.eq.s32.totalorder %v212, %v323
      %vm442 = vcmp.eq.s32.totalorder %v212, %v326
      %vm443 = vcmp.eq.s32.totalorder %v212, %v329
      %vm444 = vcmp.eq.s32.totalorder %v212, %v332
      %vm445 = vcmp.eq.s32.totalorder %v212, %v335
      %vm446 = vcmp.eq.s32.totalorder %v212, %v338
      %vm447 = vcmp.eq.s32.totalorder %v212, %v341
      %vm448 = vcmp.eq.s32.totalorder %v212, %v344
      %vm449 = vcmp.eq.s32.totalorder %v212, %v347
      %vm450 = vcmp.eq.s32.totalorder %v212, %v350
      %vm451 = vcmp.eq.s32.totalorder %v212, %v353
      %vm452 = vcmp.eq.s32.totalorder %v212, %v356
      %vm453 = vcmp.eq.s32.totalorder %v212, %v359
      %vm454 = vcmp.eq.s32.totalorder %v212, %v362
      %vm455 = vcmp.eq.s32.totalorder %v212, %v365
      %vm456 = vcmp.eq.s32.totalorder %v212, %v368
      %vm457 = vcmp.eq.s32.totalorder %v212, %v371
      %vm458 = vcmp.eq.s32.totalorder %v212, %v374
      %vm459 = vcmp.eq.s32.totalorder %v212, %v377
      %vm460 = vcmp.eq.s32.totalorder %v212, %v380
      %vm461 = vcmp.eq.s32.totalorder %v212, %v383
      %vm462 = vcmp.eq.s32.totalorder %v212, %v386
      %vm463 = vcmp.eq.s32.totalorder %v212, %v389
      %vm464 = vcmp.eq.s32.totalorder %v212, %v392
      %vm465 = vcmp.eq.s32.totalorder %v212, %v395
      %vm466 = vcmp.eq.s32.totalorder %v212, %v398
      %vm467 = vcmp.eq.s32.totalorder %v212, %v401
      %vm468 = vcmp.eq.s32.totalorder %v212, %v404
      %469 = vset.pattern.permute.xlu0 1
      %470 = vperm.xlu0 %469, %v147
      %v471 = vpop.permute.xlu0 %470
      %472 = vset.pattern.permute.xlu0 1
      %473 = vperm.xlu0 %472, %v148
      %v474 = vpop.permute.xlu0 %473
      %475 = vset.pattern.permute.xlu0 1
      %476 = vperm.xlu0 %475, %v149
      %v477 = vpop.permute.xlu0 %476
      %478 = vset.pattern.permute.xlu0 1
      %479 = vperm.xlu0 %478, %v150
      %v480 = vpop.permute.xlu0 %479
      %481 = vset.pattern.permute.xlu0 1
      %482 = vperm.xlu0 %481, %v151
      %v483 = vpop.permute.xlu0 %482
      %484 = vset.pattern.permute.xlu0 1
      %485 = vperm.xlu0 %484, %v152
      %v486 = vpop.permute.xlu0 %485
      %487 = vset.pattern.permute.xlu0 1
      %488 = vperm.xlu0 %487, %v153
      %v489 = vpop.permute.xlu0 %488
      %490 = vset.pattern.permute.xlu0 1
      %491 = vperm.xlu0 %490, %v154
      %v492 = vpop.permute.xlu0 %491
      %493 = vset.pattern.permute.xlu0 1
      %494 = vperm.xlu0 %493, %v155
      %v495 = vpop.permute.xlu0 %494
      %496 = vset.pattern.permute.xlu0 1
      %497 = vperm.xlu0 %496, %v156
      %v498 = vpop.permute.xlu0 %497
      %499 = vset.pattern.permute.xlu0 1
      %500 = vperm.xlu0 %499, %v157
      %v501 = vpop.permute.xlu0 %500
      %502 = vset.pattern.permute.xlu0 1
      %503 = vperm.xlu0 %502, %v158
      %v504 = vpop.permute.xlu0 %503
      %505 = vset.pattern.permute.xlu0 1
      %506 = vperm.xlu0 %505, %v159
      %v507 = vpop.permute.xlu0 %506
      %508 = vset.pattern.permute.xlu0 1
      %509 = vperm.xlu0 %508, %v160
      %v510 = vpop.permute.xlu0 %509
      %511 = vset.pattern.permute.xlu0 1
      %512 = vperm.xlu0 %511, %v161
      %v513 = vpop.permute.xlu0 %512
      %514 = vset.pattern.permute.xlu0 1
      %515 = vperm.xlu0 %514, %v162
      %v516 = vpop.permute.xlu0 %515
      %517 = vset.pattern.permute.xlu0 1
      %518 = vperm.xlu0 %517, %v163
      %v519 = vpop.permute.xlu0 %518
      %520 = vset.pattern.permute.xlu0 1
      %521 = vperm.xlu0 %520, %v164
      %v522 = vpop.permute.xlu0 %521
      %523 = vset.pattern.permute.xlu0 1
      %524 = vperm.xlu0 %523, %v165
      %v525 = vpop.permute.xlu0 %524
      %526 = vset.pattern.permute.xlu0 1
      %527 = vperm.xlu0 %526, %v166
      %v528 = vpop.permute.xlu0 %527
      %529 = vset.pattern.permute.xlu0 1
      %530 = vperm.xlu0 %529, %v167
      %v531 = vpop.permute.xlu0 %530
      %532 = vset.pattern.permute.xlu0 1
      %533 = vperm.xlu0 %532, %v168
      %v534 = vpop.permute.xlu0 %533
      %535 = vset.pattern.permute.xlu0 1
      %536 = vperm.xlu0 %535, %v169
      %v537 = vpop.permute.xlu0 %536
      %538 = vset.pattern.permute.xlu0 1
      %539 = vperm.xlu0 %538, %v170
      %v540 = vpop.permute.xlu0 %539
      %541 = vset.pattern.permute.xlu0 1
      %542 = vperm.xlu0 %541, %v171
      %v543 = vpop.permute.xlu0 %542
      %544 = vset.pattern.permute.xlu0 1
      %545 = vperm.xlu0 %544, %v172
      %v546 = vpop.permute.xlu0 %545
      %547 = vset.pattern.permute.xlu0 1
      %548 = vperm.xlu0 %547, %v173
      %v549 = vpop.permute.xlu0 %548
      %550 = vset.pattern.permute.xlu0 1
      %551 = vperm.xlu0 %550, %v174
      %v552 = vpop.permute.xlu0 %551
      %553 = vset.pattern.permute.xlu0 1
      %554 = vperm.xlu0 %553, %v175
      %v555 = vpop.permute.xlu0 %554
      %556 = vset.pattern.permute.xlu0 1
      %557 = vperm.xlu0 %556, %v176
      %v558 = vpop.permute.xlu0 %557
      %559 = vset.pattern.permute.xlu0 1
      %560 = vperm.xlu0 %559, %v177
      %v561 = vpop.permute.xlu0 %560
      %562 = vset.pattern.permute.xlu0 1
      %563 = vperm.xlu0 %562, %v178
      %v564 = vpop.permute.xlu0 %563
      %565 = vset.pattern.permute.xlu0 1
      %566 = vperm.xlu0 %565, %v179
      %v567 = vpop.permute.xlu0 %566
      %568 = vset.pattern.permute.xlu0 1
      %569 = vperm.xlu0 %568, %v180
      %v570 = vpop.permute.xlu0 %569
      %571 = vset.pattern.permute.xlu0 1
      %572 = vperm.xlu0 %571, %v181
      %v573 = vpop.permute.xlu0 %572
      %574 = vset.pattern.permute.xlu0 1
      %575 = vperm.xlu0 %574, %v182
      %v576 = vpop.permute.xlu0 %575
      %577 = vset.pattern.permute.xlu0 1
      %578 = vperm.xlu0 %577, %v183
      %v579 = vpop.permute.xlu0 %578
      %580 = vset.pattern.permute.xlu0 1
      %581 = vperm.xlu0 %580, %v184
      %v582 = vpop.permute.xlu0 %581
      %583 = vset.pattern.permute.xlu0 1
      %584 = vperm.xlu0 %583, %v185
      %v585 = vpop.permute.xlu0 %584
      %586 = vset.pattern.permute.xlu0 1
      %587 = vperm.xlu0 %586, %v186
      %v588 = vpop.permute.xlu0 %587
      %589 = vset.pattern.permute.xlu0 1
      %590 = vperm.xlu0 %589, %v187
      %v591 = vpop.permute.xlu0 %590
      %592 = vset.pattern.permute.xlu0 1
      %593 = vperm.xlu0 %592, %v188
      %v594 = vpop.permute.xlu0 %593
      %595 = vset.pattern.permute.xlu0 1
      %596 = vperm.xlu0 %595, %v189
      %v597 = vpop.permute.xlu0 %596
      %598 = vset.pattern.permute.xlu0 1
      %599 = vperm.xlu0 %598, %v190
      %v600 = vpop.permute.xlu0 %599
      %601 = vset.pattern.permute.xlu0 1
      %602 = vperm.xlu0 %601, %v191
      %v603 = vpop.permute.xlu0 %602
      %604 = vset.pattern.permute.xlu0 1
      %605 = vperm.xlu0 %604, %v192
      %v606 = vpop.permute.xlu0 %605
      %607 = vset.pattern.permute.xlu0 1
      %608 = vperm.xlu0 %607, %v193
      %v609 = vpop.permute.xlu0 %608
      %610 = vset.pattern.permute.xlu0 1
      %611 = vperm.xlu0 %610, %v194
      %v612 = vpop.permute.xlu0 %611
      %613 = vset.pattern.permute.xlu0 1
      %614 = vperm.xlu0 %613, %v195
      %v615 = vpop.permute.xlu0 %614
      %616 = vset.pattern.permute.xlu0 1
      %617 = vperm.xlu0 %616, %v196
      %v618 = vpop.permute.xlu0 %617
      %619 = vset.pattern.permute.xlu0 1
      %620 = vperm.xlu0 %619, %v197
      %v621 = vpop.permute.xlu0 %620
      %622 = vset.pattern.permute.xlu0 1
      %623 = vperm.xlu0 %622, %v198
      %v624 = vpop.permute.xlu0 %623
      %625 = vset.pattern.permute.xlu0 1
      %626 = vperm.xlu0 %625, %v199
      %v627 = vpop.permute.xlu0 %626
      %628 = vset.pattern.permute.xlu0 1
      %629 = vperm.xlu0 %628, %v200
      %v630 = vpop.permute.xlu0 %629
      %631 = vset.pattern.permute.xlu0 1
      %632 = vperm.xlu0 %631, %v201
      %v633 = vpop.permute.xlu0 %632
      %634 = vset.pattern.permute.xlu0 1
      %635 = vperm.xlu0 %634, %v202
      %v636 = vpop.permute.xlu0 %635
      %637 = vset.pattern.permute.xlu0 1
      %638 = vperm.xlu0 %637, %v203
      %v639 = vpop.permute.xlu0 %638
      %640 = vset.pattern.permute.xlu0 1
      %641 = vperm.xlu0 %640, %v204
      %v642 = vpop.permute.xlu0 %641
      %643 = vset.pattern.permute.xlu0 1
      %644 = vperm.xlu0 %643, %v205
      %v645 = vpop.permute.xlu0 %644
      %646 = vset.pattern.permute.xlu0 1
      %647 = vperm.xlu0 %646, %v206
      %v648 = vpop.permute.xlu0 %647
      %649 = vset.pattern.permute.xlu0 1
      %650 = vperm.xlu0 %649, %v207
      %v651 = vpop.permute.xlu0 %650
      %652 = vset.pattern.permute.xlu0 1
      %653 = vperm.xlu0 %652, %v208
      %v654 = vpop.permute.xlu0 %653
      %655 = vset.pattern.permute.xlu0 1
      %656 = vperm.xlu0 %655, %v209
      %v657 = vpop.permute.xlu0 %656
      %658 = vset.pattern.permute.xlu0 1
      %659 = vperm.xlu0 %658, %v210
      %v660 = vpop.permute.xlu0 %659
      %vm661 = vcmp.eq.s32.totalorder %v212, %v471
      %vm662 = vcmp.eq.s32.totalorder %v212, %v474
      %vm663 = vcmp.eq.s32.totalorder %v212, %v477
      %vm664 = vcmp.eq.s32.totalorder %v212, %v480
      %vm665 = vcmp.eq.s32.totalorder %v212, %v483
      %vm666 = vcmp.eq.s32.totalorder %v212, %v486
      %vm667 = vcmp.eq.s32.totalorder %v212, %v489
      %vm668 = vcmp.eq.s32.totalorder %v212, %v492
      %vm669 = vcmp.eq.s32.totalorder %v212, %v495
      %vm670 = vcmp.eq.s32.totalorder %v212, %v498
      %vm671 = vcmp.eq.s32.totalorder %v212, %v501
      %vm672 = vcmp.eq.s32.totalorder %v212, %v504
      %vm673 = vcmp.eq.s32.totalorder %v212, %v507
      %vm674 = vcmp.eq.s32.totalorder %v212, %v510
      %vm675 = vcmp.eq.s32.totalorder %v212, %v513
      %vm676 = vcmp.eq.s32.totalorder %v212, %v516
      %vm677 = vcmp.eq.s32.totalorder %v212, %v519
      %vm678 = vcmp.eq.s32.totalorder %v212, %v522
      %vm679 = vcmp.eq.s32.totalorder %v212, %v525
      %vm680 = vcmp.eq.s32.totalorder %v212, %v528
      %vm681 = vcmp.eq.s32.totalorder %v212, %v531
      %vm682 = vcmp.eq.s32.totalorder %v212, %v534
      %vm683 = vcmp.eq.s32.totalorder %v212, %v537
      %vm684 = vcmp.eq.s32.totalorder %v212, %v540
      %vm685 = vcmp.eq.s32.totalorder %v212, %v543
      %vm686 = vcmp.eq.s32.totalorder %v212, %v546
      %vm687 = vcmp.eq.s32.totalorder %v212, %v549
      %vm688 = vcmp.eq.s32.totalorder %v212, %v552
      %vm689 = vcmp.eq.s32.totalorder %v212, %v555
      %vm690 = vcmp.eq.s32.totalorder %v212, %v558
      %vm691 = vcmp.eq.s32.totalorder %v212, %v561
      %vm692 = vcmp.eq.s32.totalorder %v212, %v564
      %vm693 = vcmp.eq.s32.totalorder %v212, %v567
      %vm694 = vcmp.eq.s32.totalorder %v212, %v570
      %vm695 = vcmp.eq.s32.totalorder %v212, %v573
      %vm696 = vcmp.eq.s32.totalorder %v212, %v576
      %vm697 = vcmp.eq.s32.totalorder %v212, %v579
      %vm698 = vcmp.eq.s32.totalorder %v212, %v582
      %vm699 = vcmp.eq.s32.totalorder %v212, %v585
      %vm700 = vcmp.eq.s32.totalorder %v212, %v588
      %vm701 = vcmp.eq.s32.totalorder %v212, %v591
      %vm702 = vcmp.eq.s32.totalorder %v212, %v594
      %vm703 = vcmp.eq.s32.totalorder %v212, %v597
      %vm704 = vcmp.eq.s32.totalorder %v212, %v600
      %vm705 = vcmp.eq.s32.totalorder %v212, %v603
      %vm706 = vcmp.eq.s32.totalorder %v212, %v606
      %vm707 = vcmp.eq.s32.totalorder %v212, %v609
      %vm708 = vcmp.eq.s32.totalorder %v212, %v612
      %vm709 = vcmp.eq.s32.totalorder %v212, %v615
      %vm710 = vcmp.eq.s32.totalorder %v212, %v618
      %vm711 = vcmp.eq.s32.totalorder %v212, %v621
      %vm712 = vcmp.eq.s32.totalorder %v212, %v624
      %vm713 = vcmp.eq.s32.totalorder %v212, %v627
      %vm714 = vcmp.eq.s32.totalorder %v212, %v630
      %vm715 = vcmp.eq.s32.totalorder %v212, %v633
      %vm716 = vcmp.eq.s32.totalorder %v212, %v636
      %vm717 = vcmp.eq.s32.totalorder %v212, %v639
      %vm718 = vcmp.eq.s32.totalorder %v212, %v642
      %vm719 = vcmp.eq.s32.totalorder %v212, %v645
      %vm720 = vcmp.eq.s32.totalorder %v212, %v648
      %vm721 = vcmp.eq.s32.totalorder %v212, %v651
      %vm722 = vcmp.eq.s32.totalorder %v212, %v654
      %vm723 = vcmp.eq.s32.totalorder %v212, %v657
      %vm724 = vcmp.eq.s32.totalorder %v212, %v660
      %vm725 = vmor %vm405, %vm661
      %vm726 = vmor %vm406, %vm662
      %vm727 = vmor %vm407, %vm663
      %vm728 = vmor %vm408, %vm664
      %vm729 = vmor %vm409, %vm665
      %vm730 = vmor %vm410, %vm666
      %vm731 = vmor %vm411, %vm667
      %vm732 = vmor %vm412, %vm668
      %vm733 = vmor %vm413, %vm669
      %vm734 = vmor %vm414, %vm670
      %vm735 = vmor %vm415, %vm671
      %vm736 = vmor %vm416, %vm672
      %vm737 = vmor %vm417, %vm673
      %vm738 = vmor %vm418, %vm674
      %vm739 = vmor %vm419, %vm675
      %vm740 = vmor %vm420, %vm676
      %vm741 = vmor %vm421, %vm677
      %vm742 = vmor %vm422, %vm678
      %vm743 = vmor %vm423, %vm679
      %vm744 = vmor %vm424, %vm680
      %vm745 = vmor %vm425, %vm681
      %vm746 = vmor %vm426, %vm682
      %vm747 = vmor %vm427, %vm683
      %vm748 = vmor %vm428, %vm684
      %vm749 = vmor %vm429, %vm685
      %vm750 = vmor %vm430, %vm686
      %vm751 = vmor %vm431, %vm687
      %vm752 = vmor %vm432, %vm688
      %vm753 = vmor %vm433, %vm689
      %vm754 = vmor %vm434, %vm690
      %vm755 = vmor %vm435, %vm691
      %vm756 = vmor %vm436, %vm692
      %vm757 = vmor %vm437, %vm693
      %vm758 = vmor %vm438, %vm694
      %vm759 = vmor %vm439, %vm695
      %vm760 = vmor %vm440, %vm696
      %vm761 = vmor %vm441, %vm697
      %vm762 = vmor %vm442, %vm698
      %vm763 = vmor %vm443, %vm699
      %vm764 = vmor %vm444, %vm700
      %vm765 = vmor %vm445, %vm701
      %vm766 = vmor %vm446, %vm702
      %vm767 = vmor %vm447, %vm703
      %vm768 = vmor %vm448, %vm704
      %vm769 = vmor %vm449, %vm705
      %vm770 = vmor %vm450, %vm706
      %vm771 = vmor %vm451, %vm707
      %vm772 = vmor %vm452, %vm708
      %vm773 = vmor %vm453, %vm709
      %vm774 = vmor %vm454, %vm710
      %vm775 = vmor %vm455, %vm711
      %vm776 = vmor %vm456, %vm712
      %vm777 = vmor %vm457, %vm713
      %vm778 = vmor %vm458, %vm714
      %vm779 = vmor %vm459, %vm715
      %vm780 = vmor %vm460, %vm716
      %vm781 = vmor %vm461, %vm717
      %vm782 = vmor %vm462, %vm718
      %vm783 = vmor %vm463, %vm719
      %vm784 = vmor %vm464, %vm720
      %vm785 = vmor %vm465, %vm721
      %vm786 = vmor %vm466, %vm722
      %vm787 = vmor %vm467, %vm723
      %vm788 = vmor %vm468, %vm724
      %v789 = vsel %vm725, 1, 0
      %v790 = vsel %vm726, 1, 0
      %v791 = vsel %vm727, 1, 0
      %v792 = vsel %vm728, 1, 0
      %v793 = vsel %vm729, 1, 0
      %v794 = vsel %vm730, 1, 0
      %v795 = vsel %vm731, 1, 0
      %v796 = vsel %vm732, 1, 0
      %v797 = vsel %vm733, 1, 0
      %v798 = vsel %vm734, 1, 0
      %v799 = vsel %vm735, 1, 0
      %v800 = vsel %vm736, 1, 0
      %v801 = vsel %vm737, 1, 0
      %v802 = vsel %vm738, 1, 0
      %v803 = vsel %vm739, 1, 0
      %v804 = vsel %vm740, 1, 0
      %v805 = vsel %vm741, 1, 0
      %v806 = vsel %vm742, 1, 0
      %v807 = vsel %vm743, 1, 0
      %v808 = vsel %vm744, 1, 0
      %v809 = vsel %vm745, 1, 0
      %v810 = vsel %vm746, 1, 0
      %v811 = vsel %vm747, 1, 0
      %v812 = vsel %vm748, 1, 0
      %v813 = vsel %vm749, 1, 0
      %v814 = vsel %vm750, 1, 0
      %v815 = vsel %vm751, 1, 0
      %v816 = vsel %vm752, 1, 0
      %v817 = vsel %vm753, 1, 0
      %v818 = vsel %vm754, 1, 0
      %v819 = vsel %vm755, 1, 0
      %v820 = vsel %vm756, 1, 0
      %v821 = vsel %vm757, 1, 0
      %v822 = vsel %vm758, 1, 0
      %v823 = vsel %vm759, 1, 0
      %v824 = vsel %vm760, 1, 0
      %v825 = vsel %vm761, 1, 0
      %v826 = vsel %vm762, 1, 0
      %v827 = vsel %vm763, 1, 0
      %v828 = vsel %vm764, 1, 0
      %v829 = vsel %vm765, 1, 0
      %v830 = vsel %vm766, 1, 0
      %v831 = vsel %vm767, 1, 0
      %v832 = vsel %vm768, 1, 0
      %v833 = vsel %vm769, 1, 0
      %v834 = vsel %vm770, 1, 0
      %v835 = vsel %vm771, 1, 0
      %v836 = vsel %vm772, 1, 0
      %v837 = vsel %vm773, 1, 0
      %v838 = vsel %vm774, 1, 0
      %v839 = vsel %vm775, 1, 0
      %v840 = vsel %vm776, 1, 0
      %v841 = vsel %vm777, 1, 0
      %v842 = vsel %vm778, 1, 0
      %v843 = vsel %vm779, 1, 0
      %v844 = vsel %vm780, 1, 0
      %v845 = vsel %vm781, 1, 0
      %v846 = vsel %vm782, 1, 0
      %v847 = vsel %vm783, 1, 0
      %v848 = vsel %vm784, 1, 0
      %v849 = vsel %vm785, 1, 0
      %v850 = vsel %vm786, 1, 0
      %v851 = vsel %vm787, 1, 0
      %v852 = vsel %vm788, 1, 0
      %v853 = vcvt.s32.f32 %v789
      %v854 = vcvt.s32.f32 %v790
      %v855 = vcvt.s32.f32 %v791
      %v856 = vcvt.s32.f32 %v792
      %v857 = vcvt.s32.f32 %v793
      %v858 = vcvt.s32.f32 %v794
      %v859 = vcvt.s32.f32 %v795
      %v860 = vcvt.s32.f32 %v796
      %v861 = vcvt.s32.f32 %v797
      %v862 = vcvt.s32.f32 %v798
      %v863 = vcvt.s32.f32 %v799
      %v864 = vcvt.s32.f32 %v800
      %v865 = vcvt.s32.f32 %v801
      %v866 = vcvt.s32.f32 %v802
      %v867 = vcvt.s32.f32 %v803
      %v868 = vcvt.s32.f32 %v804
      %v869 = vcvt.s32.f32 %v805
      %v870 = vcvt.s32.f32 %v806
      %v871 = vcvt.s32.f32 %v807
      %v872 = vcvt.s32.f32 %v808
      %v873 = vcvt.s32.f32 %v809
      %v874 = vcvt.s32.f32 %v810
      %v875 = vcvt.s32.f32 %v811
      %v876 = vcvt.s32.f32 %v812
      %v877 = vcvt.s32.f32 %v813
      %v878 = vcvt.s32.f32 %v814
      %v879 = vcvt.s32.f32 %v815
      %v880 = vcvt.s32.f32 %v816
      %v881 = vcvt.s32.f32 %v817
      %v882 = vcvt.s32.f32 %v818
      %v883 = vcvt.s32.f32 %v819
      %v884 = vcvt.s32.f32 %v820
      %v885 = vcvt.s32.f32 %v821
      %v886 = vcvt.s32.f32 %v822
      %v887 = vcvt.s32.f32 %v823
      %v888 = vcvt.s32.f32 %v824
      %v889 = vcvt.s32.f32 %v825
      %v890 = vcvt.s32.f32 %v826
      %v891 = vcvt.s32.f32 %v827
      %v892 = vcvt.s32.f32 %v828
      %v893 = vcvt.s32.f32 %v829
      %v894 = vcvt.s32.f32 %v830
      %v895 = vcvt.s32.f32 %v831
      %v896 = vcvt.s32.f32 %v832
      %v897 = vcvt.s32.f32 %v833
      %v898 = vcvt.s32.f32 %v834
      %v899 = vcvt.s32.f32 %v835
      %v900 = vcvt.s32.f32 %v836
      %v901 = vcvt.s32.f32 %v837
      %v902 = vcvt.s32.f32 %v838
      %v903 = vcvt.s32.f32 %v839
      %v904 = vcvt.s32.f32 %v840
      %v905 = vcvt.s32.f32 %v841
      %v906 = vcvt.s32.f32 %v842
      %v907 = vcvt.s32.f32 %v843
      %v908 = vcvt.s32.f32 %v844
      %v909 = vcvt.s32.f32 %v845
      %v910 = vcvt.s32.f32 %v846
      %v911 = vcvt.s32.f32 %v847
      %v912 = vcvt.s32.f32 %v848
      %v913 = vcvt.s32.f32 %v849
      %v914 = vcvt.s32.f32 %v850
      %v915 = vcvt.s32.f32 %v851
      %v916 = vcvt.s32.f32 %v852
      %v917 = vld [vmem:[%s1] sm:$0xff]
      %v918 = vld [vmem:[%s1 + $0x8] sm:$0xff]
      %v919 = vld [vmem:[%s1 + $0x10] sm:$0xff]
      %v920 = vld [vmem:[%s1 + $0x18] sm:$0xff]
      %v921 = vld [vmem:[%s1 + $0x20] sm:$0xff]
      %v922 = vld [vmem:[%s1 + $0x28] sm:$0xff]
      %v923 = vld [vmem:[%s1 + $0x30] sm:$0xff]
      %v924 = vld [vmem:[%s1 + $0x38] sm:$0xff]
      %v925 = vld [vmem:[%s1 + $0x40] sm:$0xff]
      %v926 = vld [vmem:[%s1 + $0x48] sm:$0xff]
      %v927 = vld [vmem:[%s1 + $0x50] sm:$0xff]
      %v928 = vld [vmem:[%s1 + $0x58] sm:$0xff]
      %v929 = vld [vmem:[%s1 + $0x60] sm:$0xff]
      %v930 = vld [vmem:[%s1 + $0x68] sm:$0xff]
      %v931 = vld [vmem:[%s1 + $0x70] sm:$0xff]
      %v932 = vld [vmem:[%s1 + $0x78] sm:$0xff]
      %933 = vmatprep.subr.mxu0 0.0
      %934 = vmatpush1.msra.mxu0 %v917
      %935 = vmatprep.subr.mxu0 0.0
      %936 = vmatpush1.msra.mxu0 %v918
      %937 = vmatprep.subr.mxu0 0.0
      %938 = vmatpush1.msra.mxu0 %v919
      %939 = vmatprep.subr.mxu0 0.0
      %940 = vmatpush1.msra.mxu0 %v920
      %941 = vmatprep.subr.mxu0 0.0
      %942 = vmatpush1.msra.mxu0 %v921
      %943 = vmatprep.subr.mxu0 0.0
      %944 = vmatpush1.msra.mxu0 %v922
      %945 = vmatprep.subr.mxu0 0.0
      %946 = vmatpush1.msra.mxu0 %v923
      %947 = vmatprep.subr.mxu0 0.0
      %948 = vmatpush1.msra.mxu0 %v924
      %949 = vmatprep.subr.mxu0 0.0
      %950 = vmatpush1.msra.mxu0 %v925
      %951 = vmatprep.subr.mxu0 0.0
      %952 = vmatpush1.msra.mxu0 %v926
      %953 = vmatprep.subr.mxu0 0.0
      %954 = vmatpush1.msra.mxu0 %v927
      %955 = vmatprep.subr.mxu0 0.0
      %956 = vmatpush1.msra.mxu0 %v928
      %957 = vmatprep.subr.mxu0 0.0
      %958 = vmatpush1.msra.mxu0 %v929
      %959 = vmatprep.subr.mxu0 0.0
      %960 = vmatpush1.msra.mxu0 %v930
      %961 = vmatprep.subr.mxu0 0.0
      %962 = vmatpush1.msra.mxu0 %v931
      %963 = vmatprep.subr.mxu0 0.0
      %964 = vmatpush1.msra.mxu0 %v932
      %965 = vmatprep.subr.mxu0 0.0
      %966 = vmatpush1.msra.mxu0 0.0
      %967 = vmatprep.subr.mxu0 0.0
      %968 = vmatpush1.msra.mxu0 0.0
      %969 = vmatprep.subr.mxu0 0.0
      %970 = vmatpush1.msra.mxu0 0.0
      %971 = vmatprep.subr.mxu0 0.0
      %972 = vmatpush1.msra.mxu0 0.0
      %973 = vmatprep.subr.mxu0 0.0
      %974 = vmatpush1.msra.mxu0 0.0
      %975 = vmatprep.subr.mxu0 0.0
      %976 = vmatpush1.msra.mxu0 0.0
      %977 = vmatprep.subr.mxu0 0.0
      %978 = vmatpush1.msra.mxu0 0.0
      %979 = vmatprep.subr.mxu0 0.0
      %980 = vmatpush1.msra.mxu0 0.0
      %981 = vmatprep.subr.mxu0 0.0
      %982 = vmatpush1.msra.mxu0 0.0
      %983 = vmatprep.subr.mxu0 0.0
      %984 = vmatpush1.msra.mxu0 0.0
      %985 = vmatprep.subr.mxu0 0.0
      %986 = vmatpush1.msra.mxu0 0.0
      %987 = vmatprep.subr.mxu0 0.0
      %988 = vmatpush1.msra.mxu0 0.0
      %989 = vmatprep.subr.mxu0 0.0
      %990 = vmatpush1.msra.mxu0 0.0
      %991 = vmatprep.subr.mxu0 0.0
      %992 = vmatpush1.msra.mxu0 0.0
      %993 = vmatprep.subr.mxu0 0.0
      %994 = vmatpush1.msra.mxu0 0.0
      %995 = vmatprep.subr.mxu0 0.0
      %996 = vmatpush1.msra.mxu0 0.0
      %997 = vmatprep.mubr.f32.mxu0 0.0
      %998 = vmatmul.mubr.f32.gmra.mrb[0].mxu0 %v853
      %v999 = vpop.f32.mrb[0].mxu0
      %v1000 = vadd.f32 0.0, %v999
      %v1001 = vpop.f32.mrb[0].mxu0
      %1002 = vmatprep.mubr.f32.mxu0 0.0
      %1003 = vmatmul.mubr.f32.gmra.mrb[0].mxu0 %v854
      %v1004 = vpop.f32.mrb[0].mxu0
      %v1005 = vadd.f32 0.0, %v1004
      %v1006 = vpop.f32.mrb[0].mxu0
      %1007 = vmatprep.mubr.f32.mxu0 0.0
      %1008 = vmatmul.mubr.f32.gmra.mrb[0].mxu0 %v855
      %v1009 = vpop.f32.mrb[0].mxu0
      %v1010 = vadd.f32 0.0, %v1009
      %v1011 = vpop.f32.mrb[0].mxu0
      %1012 = vmatprep.mubr.f32.mxu0 0.0
      %1013 = vmatmul.mubr.f32.gmra.mrb[0].mxu0 %v856
      %v1014 = vpop.f32.mrb[0].mxu0
      %v1015 = vadd.f32 0.0, %v1014
      %v1016 = vpop.f32.mrb[0].mxu0
      %1017 = vmatprep.mubr.f32.mxu0 0.0
      %1018 = vmatmul.mubr.f32.gmra.mrb[0].mxu0 %v857
      %v1019 = vpop.f32.mrb[0].mxu0
      %v1020 = vadd.f32 0.0, %v1019
      %v1021 = vpop.f32.mrb[0].mxu0
      %1022 = vmatprep.mubr.f32.mxu0 0.0
      %1023 = vmatmul.mubr.f32.gmra.mrb[0].mxu0 %v858
      %v1024 = vpop.f32.mrb[0].mxu0
      %v1025 = vadd.f32 0.0, %v1024
      %v1026 = vpop.f32.mrb[0].mxu0
      %1027 = vmatprep.mubr.f32.mxu0 0.0
      %1028 = vmatmul.mubr.f32.gmra.mrb[0].mxu0 %v859
      %v1029 = vpop.f32.mrb[0].mxu0
      %v1030 = vadd.f32 0.0, %v1029
      %v1031 = vpop.f32.mrb[0].mxu0
      %1032 = vmatprep.mubr.f32.mxu0 0.0
      %1033 = vmatmul.mubr.f32.gmra.mrb[0].mxu0 %v860
      %v1034 = vpop.f32.mrb[0].mxu0
      %v1035 = vadd.f32 0.0, %v1034
      %v1036 = vpop.f32.mrb[0].mxu0
      %1037 = vmatprep.mubr.f32.mxu0 0.0
      %1038 = vmatmul.mubr.f32.gmra.mrb[0].mxu0 %v861
      %v1039 = vpop.f32.mrb[0].mxu0
      %v1040 = vadd.f32 0.0, %v1039
      %v1041 = vpop.f32.mrb[0].mxu0
      %1042 = vmatprep.mubr.f32.mxu0 0.0
      %1043 = vmatmul.mubr.f32.gmra.mrb[0].mxu0 %v862
      %v1044 = vpop.f32.mrb[0].mxu0
      %v1045 = vadd.f32 0.0, %v1044
      %v1046 = vpop.f32.mrb[0].mxu0
      %1047 = vmatprep.mubr.f32.mxu0 0.0
      %1048 = vmatmul.mubr.f32.gmra.mrb[0].mxu0 %v863
      %v1049 = vpop.f32.mrb[0].mxu0
      %v1050 = vadd.f32 0.0, %v1049
      %v1051 = vpop.f32.mrb[0].mxu0
      %1052 = vmatprep.mubr.f32.mxu0 0.0
      %1053 = vmatmul.mubr.f32.gmra.mrb[0].mxu0 %v864
      %v1054 = vpop.f32.mrb[0].mxu0
      %v1055 = vadd.f32 0.0, %v1054
      %v1056 = vpop.f32.mrb[0].mxu0
      %1057 = vmatprep.mubr.f32.mxu0 0.0
      %1058 = vmatmul.mubr.f32.gmra.mrb[0].mxu0 %v865
      %v1059 = vpop.f32.mrb[0].mxu0
      %v1060 = vadd.f32 0.0, %v1059
      %v1061 = vpop.f32.mrb[0].mxu0
      %1062 = vmatprep.mubr.f32.mxu0 0.0
      %1063 = vmatmul.mubr.f32.gmra.mrb[0].mxu0 %v866
      %v1064 = vpop.f32.mrb[0].mxu0
      %v1065 = vadd.f32 0.0, %v1064
      %v1066 = vpop.f32.mrb[0].mxu0
      %1067 = vmatprep.mubr.f32.mxu0 0.0
      %1068 = vmatmul.mubr.f32.gmra.mrb[0].mxu0 %v867
      %v1069 = vpop.f32.mrb[0].mxu0
      %v1070 = vadd.f32 0.0, %v1069
      %v1071 = vpop.f32.mrb[0].mxu0
      %1072 = vmatprep.mubr.f32.mxu0 0.0
      %1073 = vmatmul.mubr.f32.gmra.mrb[0].mxu0 %v868
      %v1074 = vpop.f32.mrb[0].mxu0
      %v1075 = vadd.f32 0.0, %v1074
      %v1076 = vpop.f32.mrb[0].mxu0
      %1077 = vmatprep.mubr.f32.mxu0 0.0
      %1078 = vmatmul.mubr.f32.gmra.mrb[0].mxu0 %v869
      %v1079 = vpop.f32.mrb[0].mxu0
      %v1080 = vadd.f32 0.0, %v1079
      %v1081 = vpop.f32.mrb[0].mxu0
      %1082 = vmatprep.mubr.f32.mxu0 0.0
      %1083 = vmatmul.mubr.f32.gmra.mrb[0].mxu0 %v870
      %v1084 = vpop.f32.mrb[0].mxu0
      %v1085 = vadd.f32 0.0, %v1084
      %v1086 = vpop.f32.mrb[0].mxu0
      %1087 = vmatprep.mubr.f32.mxu0 0.0
      %1088 = vmatmul.mubr.f32.gmra.mrb[0].mxu0 %v871
      %v1089 = vpop.f32.mrb[0].mxu0
      %v1090 = vadd.f32 0.0, %v1089
      %v1091 = vpop.f32.mrb[0].mxu0
      %1092 = vmatprep.mubr.f32.mxu0 0.0
      %1093 = vmatmul.mubr.f32.gmra.mrb[0].mxu0 %v872
      %v1094 = vpop.f32.mrb[0].mxu0
      %v1095 = vadd.f32 0.0, %v1094
      %v1096 = vpop.f32.mrb[0].mxu0
      %1097 = vmatprep.mubr.f32.mxu0 0.0
      %1098 = vmatmul.mubr.f32.gmra.mrb[0].mxu0 %v873
      %v1099 = vpop.f32.mrb[0].mxu0
      %v1100 = vadd.f32 0.0, %v1099
      %v1101 = vpop.f32.mrb[0].mxu0
      %1102 = vmatprep.mubr.f32.mxu0 0.0
      %1103 = vmatmul.mubr.f32.gmra.mrb[0].mxu0 %v874
      %v1104 = vpop.f32.mrb[0].mxu0
      %v1105 = vadd.f32 0.0, %v1104
      %v1106 = vpop.f32.mrb[0].mxu0
      %1107 = vmatprep.mubr.f32.mxu0 0.0
      %1108 = vmatmul.mubr.f32.gmra.mrb[0].mxu0 %v875
      %v1109 = vpop.f32.mrb[0].mxu0
      %v1110 = vadd.f32 0.0, %v1109
      %v1111 = vpop.f32.mrb[0].mxu0
      %1112 = vmatprep.mubr.f32.mxu0 0.0
      %1113 = vmatmul.mubr.f32.gmra.mrb[0].mxu0 %v876
      %v1114 = vpop.f32.mrb[0].mxu0
      %v1115 = vadd.f32 0.0, %v1114
      %v1116 = vpop.f32.mrb[0].mxu0
      %1117 = vmatprep.mubr.f32.mxu0 0.0
      %1118 = vmatmul.mubr.f32.gmra.mrb[0].mxu0 %v877
      %v1119 = vpop.f32.mrb[0].mxu0
      %v1120 = vadd.f32 0.0, %v1119
      %v1121 = vpop.f32.mrb[0].mxu0
      %1122 = vmatprep.mubr.f32.mxu0 0.0
      %1123 = vmatmul.mubr.f32.gmra.mrb[0].mxu0 %v878
      %v1124 = vpop.f32.mrb[0].mxu0
      %v1125 = vadd.f32 0.0, %v1124
      %v1126 = vpop.f32.mrb[0].mxu0
      %1127 = vmatprep.mubr.f32.mxu0 0.0
      %1128 = vmatmul.mubr.f32.gmra.mrb[0].mxu0 %v879
      %v1129 = vpop.f32.mrb[0].mxu0
      %v1130 = vadd.f32 0.0, %v1129
      %v1131 = vpop.f32.mrb[0].mxu0
      %1132 = vmatprep.mubr.f32.mxu0 0.0
      %1133 = vmatmul.mubr.f32.gmra.mrb[0].mxu0 %v880
      %v1134 = vpop.f32.mrb[0].mxu0
      %v1135 = vadd.f32 0.0, %v1134
      %v1136 = vpop.f32.mrb[0].mxu0
      %1137 = vmatprep.mubr.f32.mxu0 0.0
      %1138 = vmatmul.mubr.f32.gmra.mrb[0].mxu0 %v881
      %v1139 = vpop.f32.mrb[0].mxu0
      %v1140 = vadd.f32 0.0, %v1139
      %v1141 = vpop.f32.mrb[0].mxu0
      %1142 = vmatprep.mubr.f32.mxu0 0.0
      %1143 = vmatmul.mubr.f32.gmra.mrb[0].mxu0 %v882
      %v1144 = vpop.f32.mrb[0].mxu0
      %v1145 = vadd.f32 0.0, %v1144
      %v1146 = vpop.f32.mrb[0].mxu0
      %1147 = vmatprep.mubr.f32.mxu0 0.0
      %1148 = vmatmul.mubr.f32.gmra.mrb[0].mxu0 %v883
      %v1149 = vpop.f32.mrb[0].mxu0
      %v1150 = vadd.f32 0.0, %v1149
      %v1151 = vpop.f32.mrb[0].mxu0
      %1152 = vmatprep.mubr.f32.mxu0 0.0
      %1153 = vmatmul.mubr.f32.gmra.mrb[0].mxu0 %v884
      %v1154 = vpop.f32.mrb[0].mxu0
      %v1155 = vadd.f32 0.0, %v1154
      %v1156 = vpop.f32.mrb[0].mxu0
      %1157 = vmatprep.mubr.f32.mxu0 0.0
      %1158 = vmatmul.mubr.f32.gmra.mrb[0].mxu0 %v885
      %v1159 = vpop.f32.mrb[0].mxu0
      %v1160 = vadd.f32 0.0, %v1159
      %v1161 = vpop.f32.mrb[0].mxu0
      %1162 = vmatprep.mubr.f32.mxu0 0.0
      %1163 = vmatmul.mubr.f32.gmra.mrb[0].mxu0 %v886
      %v1164 = vpop.f32.mrb[0].mxu0
      %v1165 = vadd.f32 0.0, %v1164
      %v1166 = vpop.f32.mrb[0].mxu0
      %1167 = vmatprep.mubr.f32.mxu0 0.0
      %1168 = vmatmul.mubr.f32.gmra.mrb[0].mxu0 %v887
      %v1169 = vpop.f32.mrb[0].mxu0
      %v1170 = vadd.f32 0.0, %v1169
      %v1171 = vpop.f32.mrb[0].mxu0
      %1172 = vmatprep.mubr.f32.mxu0 0.0
      %1173 = vmatmul.mubr.f32.gmra.mrb[0].mxu0 %v888
      %v1174 = vpop.f32.mrb[0].mxu0
      %v1175 = vadd.f32 0.0, %v1174
      %v1176 = vpop.f32.mrb[0].mxu0
      %1177 = vmatprep.mubr.f32.mxu0 0.0
      %1178 = vmatmul.mubr.f32.gmra.mrb[0].mxu0 %v889
      %v1179 = vpop.f32.mrb[0].mxu0
      %v1180 = vadd.f32 0.0, %v1179
      %v1181 = vpop.f32.mrb[0].mxu0
      %1182 = vmatprep.mubr.f32.mxu0 0.0
      %1183 = vmatmul.mubr.f32.gmra.mrb[0].mxu0 %v890
      %v1184 = vpop.f32.mrb[0].mxu0
      %v1185 = vadd.f32 0.0, %v1184
      %v1186 = vpop.f32.mrb[0].mxu0
      %1187 = vmatprep.mubr.f32.mxu0 0.0
      %1188 = vmatmul.mubr.f32.gmra.mrb[0].mxu0 %v891
      %v1189 = vpop.f32.mrb[0].mxu0
      %v1190 = vadd.f32 0.0, %v1189
      %v1191 = vpop.f32.mrb[0].mxu0
      %1192 = vmatprep.mubr.f32.mxu0 0.0
      %1193 = vmatmul.mubr.f32.gmra.mrb[0].mxu0 %v892
      %v1194 = vpop.f32.mrb[0].mxu0
      %v1195 = vadd.f32 0.0, %v1194
      %v1196 = vpop.f32.mrb[0].mxu0
      %1197 = vmatprep.mubr.f32.mxu0 0.0
      %1198 = vmatmul.mubr.f32.gmra.mrb[0].mxu0 %v893
      %v1199 = vpop.f32.mrb[0].mxu0
      %v1200 = vadd.f32 0.0, %v1199
      %v1201 = vpop.f32.mrb[0].mxu0
      %1202 = vmatprep.mubr.f32.mxu0 0.0
      %1203 = vmatmul.mubr.f32.gmra.mrb[0].mxu0 %v894
      %v1204 = vpop.f32.mrb[0].mxu0
      %v1205 = vadd.f32 0.0, %v1204
      %v1206 = vpop.f32.mrb[0].mxu0
      %1207 = vmatprep.mubr.f32.mxu0 0.0
      %1208 = vmatmul.mubr.f32.gmra.mrb[0].mxu0 %v895
      %v1209 = vpop.f32.mrb[0].mxu0
      %v1210 = vadd.f32 0.0, %v1209
      %v1211 = vpop.f32.mrb[0].mxu0
      %1212 = vmatprep.mubr.f32.mxu0 0.0
      %1213 = vmatmul.mubr.f32.gmra.mrb[0].mxu0 %v896
      %v1214 = vpop.f32.mrb[0].mxu0
      %v1215 = vadd.f32 0.0, %v1214
      %v1216 = vpop.f32.mrb[0].mxu0
      %1217 = vmatprep.mubr.f32.mxu0 0.0
      %1218 = vmatmul.mubr.f32.gmra.mrb[0].mxu0 %v897
      %v1219 = vpop.f32.mrb[0].mxu0
      %v1220 = vadd.f32 0.0, %v1219
      %v1221 = vpop.f32.mrb[0].mxu0
      %1222 = vmatprep.mubr.f32.mxu0 0.0
      %1223 = vmatmul.mubr.f32.gmra.mrb[0].mxu0 %v898
      %v1224 = vpop.f32.mrb[0].mxu0
      %v1225 = vadd.f32 0.0, %v1224
      %v1226 = vpop.f32.mrb[0].mxu0
      %1227 = vmatprep.mubr.f32.mxu0 0.0
      %1228 = vmatmul.mubr.f32.gmra.mrb[0].mxu0 %v899
      %v1229 = vpop.f32.mrb[0].mxu0
      %v1230 = vadd.f32 0.0, %v1229
      %v1231 = vpop.f32.mrb[0].mxu0
      %1232 = vmatprep.mubr.f32.mxu0 0.0
      %1233 = vmatmul.mubr.f32.gmra.mrb[0].mxu0 %v900
      %v1234 = vpop.f32.mrb[0].mxu0
      %v1235 = vadd.f32 0.0, %v1234
      %v1236 = vpop.f32.mrb[0].mxu0
      %1237 = vmatprep.mubr.f32.mxu0 0.0
      %1238 = vmatmul.mubr.f32.gmra.mrb[0].mxu0 %v901
      %v1239 = vpop.f32.mrb[0].mxu0
      %v1240 = vadd.f32 0.0, %v1239
      %v1241 = vpop.f32.mrb[0].mxu0
      %1242 = vmatprep.mubr.f32.mxu0 0.0
      %1243 = vmatmul.mubr.f32.gmra.mrb[0].mxu0 %v902
      %v1244 = vpop.f32.mrb[0].mxu0
      %v1245 = vadd.f32 0.0, %v1244
      %v1246 = vpop.f32.mrb[0].mxu0
      %1247 = vmatprep.mubr.f32.mxu0 0.0
      %1248 = vmatmul.mubr.f32.gmra.mrb[0].mxu0 %v903
      %v1249 = vpop.f32.mrb[0].mxu0
      %v1250 = vadd.f32 0.0, %v1249
      %v1251 = vpop.f32.mrb[0].mxu0
      %1252 = vmatprep.mubr.f32.mxu0 0.0
      %1253 = vmatmul.mubr.f32.gmra.mrb[0].mxu0 %v904
      %v1254 = vpop.f32.mrb[0].mxu0
      %v1255 = vadd.f32 0.0, %v1254
      %v1256 = vpop.f32.mrb[0].mxu0
      %1257 = vmatprep.mubr.f32.mxu0 0.0
      %1258 = vmatmul.mubr.f32.gmra.mrb[0].mxu0 %v905
      %v1259 = vpop.f32.mrb[0].mxu0
      %v1260 = vadd.f32 0.0, %v1259
      %v1261 = vpop.f32.mrb[0].mxu0
      %1262 = vmatprep.mubr.f32.mxu0 0.0
      %1263 = vmatmul.mubr.f32.gmra.mrb[0].mxu0 %v906
      %v1264 = vpop.f32.mrb[0].mxu0
      %v1265 = vadd.f32 0.0, %v1264
      %v1266 = vpop.f32.mrb[0].mxu0
      %1267 = vmatprep.mubr.f32.mxu0 0.0
      %1268 = vmatmul.mubr.f32.gmra.mrb[0].mxu0 %v907
      %v1269 = vpop.f32.mrb[0].mxu0
      %v1270 = vadd.f32 0.0, %v1269
      %v1271 = vpop.f32.mrb[0].mxu0
      %1272 = vmatprep.mubr.f32.mxu0 0.0
      %1273 = vmatmul.mubr.f32.gmra.mrb[0].mxu0 %v908
      %v1274 = vpop.f32.mrb[0].mxu0
      %v1275 = vadd.f32 0.0, %v1274
      %v1276 = vpop.f32.mrb[0].mxu0
      %1277 = vmatprep.mubr.f32.mxu0 0.0
      %1278 = vmatmul.mubr.f32.gmra.mrb[0].mxu0 %v909
      %v1279 = vpop.f32.mrb[0].mxu0
      %v1280 = vadd.f32 0.0, %v1279
      %v1281 = vpop.f32.mrb[0].mxu0
      %1282 = vmatprep.mubr.f32.mxu0 0.0
      %1283 = vmatmul.mubr.f32.gmra.mrb[0].mxu0 %v910
      %v1284 = vpop.f32.mrb[0].mxu0
      %v1285 = vadd.f32 0.0, %v1284
      %v1286 = vpop.f32.mrb[0].mxu0
      %1287 = vmatprep.mubr.f32.mxu0 0.0
      %1288 = vmatmul.mubr.f32.gmra.mrb[0].mxu0 %v911
      %v1289 = vpop.f32.mrb[0].mxu0
      %v1290 = vadd.f32 0.0, %v1289
      %v1291 = vpop.f32.mrb[0].mxu0
      %1292 = vmatprep.mubr.f32.mxu0 0.0
      %1293 = vmatmul.mubr.f32.gmra.mrb[0].mxu0 %v912
      %v1294 = vpop.f32.mrb[0].mxu0
      %v1295 = vadd.f32 0.0, %v1294
      %v1296 = vpop.f32.mrb[0].mxu0
      %1297 = vmatprep.mubr.f32.mxu0 0.0
      %1298 = vmatmul.mubr.f32.gmra.mrb[0].mxu0 %v913
      %v1299 = vpop.f32.mrb[0].mxu0
      %v1300 = vadd.f32 0.0, %v1299
      %v1301 = vpop.f32.mrb[0].mxu0
      %1302 = vmatprep.mubr.f32.mxu0 0.0
      %1303 = vmatmul.mubr.f32.gmra.mrb[0].mxu0 %v914
      %v1304 = vpop.f32.mrb[0].mxu0
      %v1305 = vadd.f32 0.0, %v1304
      %v1306 = vpop.f32.mrb[0].mxu0
      %1307 = vmatprep.mubr.f32.mxu0 0.0
      %1308 = vmatmul.mubr.f32.gmra.mrb[0].mxu0 %v915
      %v1309 = vpop.f32.mrb[0].mxu0
      %v1310 = vadd.f32 0.0, %v1309
      %v1311 = vpop.f32.mrb[0].mxu0
      %1312 = vmatprep.mubr.f32.mxu0 0.0
      %1313 = vmatmul.mubr.f32.gmra.mrb[0].mxu0 %v916
      %v1314 = vpop.f32.mrb[0].mxu0
      %v1315 = vadd.f32 0.0, %v1314
      %v1316 = vpop.f32.mrb[0].mxu0
      %1317 = vdwg.mxu0
      %vm1318 = vcmask 261120
      %1319 = vst.msk [vmem:[%s145] sm:$0xff] %vm1318, %v1000
      %1320 = vst.msk [vmem:[%s145 + $0x8] sm:$0xff] %vm1318, %v1005
      %1321 = vst.msk [vmem:[%s145 + $0x10] sm:$0xff] %vm1318, %v1010
      %1322 = vst.msk [vmem:[%s145 + $0x18] sm:$0xff] %vm1318, %v1015
      %1323 = vst.msk [vmem:[%s145 + $0x20] sm:$0xff] %vm1318, %v1020
      %1324 = vst.msk [vmem:[%s145 + $0x28] sm:$0xff] %vm1318, %v1025
      %1325 = vst.msk [vmem:[%s145 + $0x30] sm:$0xff] %vm1318, %v1030
      %1326 = vst.msk [vmem:[%s145 + $0x38] sm:$0xff] %vm1318, %v1035
      %1327 = vst.msk [vmem:[%s145 + $0x40] sm:$0xff] %vm1318, %v1040
      %1328 = vst.msk [vmem:[%s145 + $0x48] sm:$0xff] %vm1318, %v1045
      %1329 = vst.msk [vmem:[%s145 + $0x50] sm:$0xff] %vm1318, %v1050
      %1330 = vst.msk [vmem:[%s145 + $0x58] sm:$0xff] %vm1318, %v1055
      %1331 = vst.msk [vmem:[%s145 + $0x60] sm:$0xff] %vm1318, %v1060
      %1332 = vst.msk [vmem:[%s145 + $0x68] sm:$0xff] %vm1318, %v1065
      %1333 = vst.msk [vmem:[%s145 + $0x70] sm:$0xff] %vm1318, %v1070
      %1334 = vst.msk [vmem:[%s145 + $0x78] sm:$0xff] %vm1318, %v1075
      %1335 = vst.msk [vmem:[%s145 + $0x80] sm:$0xff] %vm1318, %v1080
      %1336 = vst.msk [vmem:[%s145 + $0x88] sm:$0xff] %vm1318, %v1085
      %1337 = vst.msk [vmem:[%s145 + $0x90] sm:$0xff] %vm1318, %v1090
      %1338 = vst.msk [vmem:[%s145 + $0x98] sm:$0xff] %vm1318, %v1095
      %1339 = vst.msk [vmem:[%s145 + $0xa0] sm:$0xff] %vm1318, %v1100
      %1340 = vst.msk [vmem:[%s145 + $0xa8] sm:$0xff] %vm1318, %v1105
      %1341 = vst.msk [vmem:[%s145 + $0xb0] sm:$0xff] %vm1318, %v1110
      %1342 = vst.msk [vmem:[%s145 + $0xb8] sm:$0xff] %vm1318, %v1115
      %1343 = vst.msk [vmem:[%s145 + $0xc0] sm:$0xff] %vm1318, %v1120
      %1344 = vst.msk [vmem:[%s145 + $0xc8] sm:$0xff] %vm1318, %v1125
      %1345 = vst.msk [vmem:[%s145 + $0xd0] sm:$0xff] %vm1318, %v1130
      %1346 = vst.msk [vmem:[%s145 + $0xd8] sm:$0xff] %vm1318, %v1135
      %1347 = vst.msk [vmem:[%s145 + $0xe0] sm:$0xff] %vm1318, %v1140
      %1348 = vst.msk [vmem:[%s145 + $0xe8] sm:$0xff] %vm1318, %v1145
      %1349 = vst.msk [vmem:[%s145 + $0xf0] sm:$0xff] %vm1318, %v1150
      %1350 = vst.msk [vmem:[%s145 + $0xf8] sm:$0xff] %vm1318, %v1155
      %1351 = vst.msk [vmem:[%s145 + $0x100] sm:$0xff] %vm1318, %v1160
      %1352 = vst.msk [vmem:[%s145 + $0x108] sm:$0xff] %vm1318, %v1165
      %1353 = vst.msk [vmem:[%s145 + $0x110] sm:$0xff] %vm1318, %v1170
      %1354 = vst.msk [vmem:[%s145 + $0x118] sm:$0xff] %vm1318, %v1175
      %1355 = vst.msk [vmem:[%s145 + $0x120] sm:$0xff] %vm1318, %v1180
      %1356 = vst.msk [vmem:[%s145 + $0x128] sm:$0xff] %vm1318, %v1185
      %1357 = vst.msk [vmem:[%s145 + $0x130] sm:$0xff] %vm1318, %v1190
      %1358 = vst.msk [vmem:[%s145 + $0x138] sm:$0xff] %vm1318, %v1195
      %1359 = vst.msk [vmem:[%s145 + $0x140] sm:$0xff] %vm1318, %v1200
      %1360 = vst.msk [vmem:[%s145 + $0x148] sm:$0xff] %vm1318, %v1205
      %1361 = vst.msk [vmem:[%s145 + $0x150] sm:$0xff] %vm1318, %v1210
      %1362 = vst.msk [vmem:[%s145 + $0x158] sm:$0xff] %vm1318, %v1215
      %1363 = vst.msk [vmem:[%s145 + $0x160] sm:$0xff] %vm1318, %v1220
      %1364 = vst.msk [vmem:[%s145 + $0x168] sm:$0xff] %vm1318, %v1225
      %1365 = vst.msk [vmem:[%s145 + $0x170] sm:$0xff] %vm1318, %v1230
      %1366 = vst.msk [vmem:[%s145 + $0x178] sm:$0xff] %vm1318, %v1235
      %1367 = vst.msk [vmem:[%s145 + $0x180] sm:$0xff] %vm1318, %v1240
      %1368 = vst.msk [vmem:[%s145 + $0x188] sm:$0xff] %vm1318, %v1245
      %1369 = vst.msk [vmem:[%s145 + $0x190] sm:$0xff] %vm1318, %v1250
      %1370 = vst.msk [vmem:[%s145 + $0x198] sm:$0xff] %vm1318, %v1255
      %1371 = vst.msk [vmem:[%s145 + $0x1a0] sm:$0xff] %vm1318, %v1260
      %1372 = vst.msk [vmem:[%s145 + $0x1a8] sm:$0xff] %vm1318, %v1265
      %1373 = vst.msk [vmem:[%s145 + $0x1b0] sm:$0xff] %vm1318, %v1270
      %1374 = vst.msk [vmem:[%s145 + $0x1b8] sm:$0xff] %vm1318, %v1275
      %1375 = vst.msk [vmem:[%s145 + $0x1c0] sm:$0xff] %vm1318, %v1280
      %1376 = vst.msk [vmem:[%s145 + $0x1c8] sm:$0xff] %vm1318, %v1285
      %1377 = vst.msk [vmem:[%s145 + $0x1d0] sm:$0xff] %vm1318, %v1290
      %1378 = vst.msk [vmem:[%s145 + $0x1d8] sm:$0xff] %vm1318, %v1295
      %1379 = vst.msk [vmem:[%s145 + $0x1e0] sm:$0xff] %vm1318, %v1300
      %1380 = vst.msk [vmem:[%s145 + $0x1e8] sm:$0xff] %vm1318, %v1305
      %1381 = vst.msk [vmem:[%s145 + $0x1f0] sm:$0xff] %vm1318, %v1310
      %1382 = vst.msk [vmem:[%s145 + $0x1f8] sm:$0xff] %vm1318, %v1315
      %s1383 = smul.u32 64, %s13
      %p1384 = scmp.lt.s32.totalorder %s1383, 127
      %s1385 = scalar_select %p1384, %s1383, 127
      %s1386 = smul.addr %s1385, 8
      %s1387 = scalar_lea.vmem %s2, %s1386
      // Predicated region
      $region29: #{apply.1} parent=27 // pred_check
        %p1388 = pneg %p78
      $region30: #{apply.1} parent=27 // pred_check_branch
        %1390 = sbr.rel (%p1388) target = $region32
      $region31: #{apply.1} parent=27 // pred_region
        %s1391 = smul.u32 64, %s13
      $region32: #{apply.1} parent=27 // pred_fallthru
        _
    $region28: #{apply.1} parent=5 // pred_fallthru
      _
    %p1392 = scmp.le.s32.totalorder 2, %s8
    // Predicated region
    $region33: #{apply.1} parent=5 // pred_check
      %p1393 = pneg %p1392
    $region34: #{apply.1} parent=5 // pred_check_branch
      %1395 = sbr.rel (%p1393) target = $region36
    $region35: #{apply.1} parent=5 // pred_region
      %s1396 = ssub.s32 %s8, 2
      // Predicated region
      $region37: #{apply.1} parent=35 // pred_check
        %p1397 = pneg %p84
      $region38: #{apply.1} parent=35 // pred_check_branch
        %1399 = sbr.rel (%p1397) target = $region40
      $region39: #{apply.1} parent=35 // pred_region
        %s1400 = smul.u32 64, %s14
        %p1401 = scmp.lt.s32.totalorder %s1400, 127
        %s1402 = scalar_select %p1401, %s1400, 127
        %s1403 = smul.addr %s1402, 8
        %s1404 = scalar_lea.vmem %s2, %s1403
      $region40: #{apply.1} parent=35 // pred_fallthru
        _
    $region36: #{apply.1} parent=5 // pred_fallthru
      _
  $region6: #{apply.1} parent=0 // loop_footer
    %s12 = sadd.s32 1, %s8
  $region7: #{apply.1} parent=0 // loop_footer_branch
    %7 = sbr.rel target = $region3
  $region8: #{apply.1} parent=0 // loop_exit
    _

</llo_original>
